<compile_context>
chip_gen: v5e
topology: v5e:2x2
jax: 0.10.0
libtpu: 0.0.40
codegen_flags: <defaults>
</compile_context>

<pallas_src>
import functools

import jax
import jax.numpy as jnp
from jax.experimental import pallas as pl
from jax.experimental.pallas import tpu as pltpu


def _round_up(x, m):
    return (x + m - 1) // m * m


def _vmem_capacity_bytes():
    """Physical per-core VMEM; falls back to the smallest (v7x) value."""
    try:
        return int(pltpu.get_tpu_info().vmem_capacity_bytes)
    except Exception:
        return 64 * 2 ** 20


def _attblock_kernel(x_ref, w_ref, b_ref,
                     out_ref, natt_ref, cla_ref, inv_ref,
                     denom_acc, pooled_acc,
                     *, n_pad, t_tile, t_valid, bb, needs_mask,
                     normalize_in_kernel):
    """One grid step: `bb` batch elements x one T tile.

    x_ref:    (bb, n_in, t_tile)        matmul dtype (bf16 by default)
    w_ref:    (2*n_pad, n_in)           fused [W_att ; W_cla]
    b_ref:    (2*n_pad, 1) f32          fused [b_att ; b_cla]
    out_ref:  (bb, n_pad, 1) f32        pooled sum(norm_att * cla) over T
    natt_ref: (bb, n_pad, t_tile)       norm_att (single tile) or exp(.) (streamed)
    cla_ref:  (bb, n_pad, t_tile)       sigmoid
    inv_ref:  (bb, n_pad, 1) f32        1 / softmax denominator
    denom_acc / pooled_acc: (bb, n_pad, 1) f32 scratch accumulators over T tiles
    """
    t_idx = pl.program_id(1)
    n_t = pl.num_programs(1)

    @pl.when(t_idx == 0)
    def _init():
        denom_acc[...] = jnp.zeros_like(denom_acc)
        pooled_acc[...] = jnp.zeros_like(pooled_acc)

    w = w_ref[...]                        # (2*n_pad, n_in)
    bias = b_ref[...]                     # (2*n_pad, 1) f32, broadcasts over T

    if needs_mask:
        # Zero-padded T columns: their logits equal the bias (not -inf), so mask
        # them out of the softmax denominator / pooled sum.
        col = jax.lax.broadcasted_iota(jnp.int32, (n_pad, t_tile), 1) + t_idx * t_tile
        valid = col < t_valid             # (n_pad, t_tile)

    for bi in range(bb):                  # static unroll over the batch block
        x = x_ref[bi]                                                   # (n_in, t_tile)
        # Single fused MXU pass for both 1x1 convs, f32 accumulation.
        y = jnp.dot(w, x, preferred_element_type=jnp.float32) + bias    # (2*n_pad, t_tile)

        att = jnp.clip(y[:n_pad, :], -10.0, 10.0)
        # Constant-shift softmax: logits are clamped to [-10, 10], so exp(l - 10)
        # lies in [e^-20, 1] and is f32-stable.  No per-row max reduction, and the
        # T axis can be streamed tile-by-tile with plain accumulation.
        e = jnp.exp(att - 10.0)
        if needs_mask:
            e = jnp.where(valid, e, 0.0)
        cla = jax.nn.sigmoid(y[n_pad:, :])

        denom_acc[bi] += jnp.sum(e, axis=-1, keepdims=True)             # (n_pad, 1)
        pooled_acc[bi] += jnp.sum(e * cla, axis=-1, keepdims=True)      # (n_pad, 1)

        cla_ref[bi] = cla.astype(cla_ref.dtype)
        if normalize_in_kernel:
            # Single T tile: the full denominator is already known here.
            inv_bi = pl.reciprocal(denom_acc[bi], approx=False)
            natt_ref[bi] = (e * inv_bi).astype(natt_ref.dtype)
        else:
            # Streaming T tiles: emit the un-normalized exp(.); the wrapper does
            # a cheap elementwise rescale by the final 1/denominator.
            natt_ref[bi] = e.astype(natt_ref.dtype)

    @pl.when(t_idx == n_t - 1)
    def _finalize():
        inv = pl.reciprocal(denom_acc[...], approx=False)               # (bb, n_pad, 1)
        out_ref[...] = (pooled_acc[...] * inv).astype(out_ref.dtype)
        inv_ref[...] = inv.astype(inv_ref.dtype)


def _build_call(*, B, n_in, T_pad, n_pad, bb, t_tile, out_dtype, t_valid,
                needs_mask, normalize_in_kernel, vmem_limit,
                single_buffer_weights):
    two_n = 2 * n_pad
    const_kwargs = (dict(pipeline_mode=pl.Buffered(1))
                    if single_buffer_weights else {})

    kernel = functools.partial(
        _attblock_kernel, n_pad=n_pad, t_tile=t_tile, t_valid=t_valid, bb=bb,
        needs_mask=needs_mask, normalize_in_kernel=normalize_in_kernel)

    return pl.pallas_call(
        kernel,
        out_shape=(
            jax.ShapeDtypeStruct((B, n_pad, 1), jnp.float32),      # pooled out
            jax.ShapeDtypeStruct((B, n_pad, T_pad), out_dtype),    # norm_att / exp
            jax.ShapeDtypeStruct((B, n_pad, T_pad), out_dtype),    # cla
            jax.ShapeDtypeStruct((B, n_pad, 1), jnp.float32),      # 1/denominator
        ),
        grid_spec=pltpu.PrefetchScalarGridSpec(
            num_scalar_prefetch=0,
            grid=(B // bb, T_pad // t_tile),
            in_specs=[
                pl.BlockSpec((bb, n_in, t_tile), lambda b, t: (b, 0, t)),
                pl.BlockSpec((two_n, n_in), lambda b, t: (0, 0), **const_kwargs),
                pl.BlockSpec((two_n, 1), lambda b, t: (0, 0), **const_kwargs),
            ],
            out_specs=[
                pl.BlockSpec((bb, n_pad, 1), lambda b, t: (b, 0, 0)),
                pl.BlockSpec((bb, n_pad, t_tile), lambda b, t: (b, 0, t)),
                pl.BlockSpec((bb, n_pad, t_tile), lambda b, t: (b, 0, t)),
                pl.BlockSpec((bb, n_pad, 1), lambda b, t: (b, 0, 0)),
            ],
            scratch_shapes=[
                pltpu.VMEM((bb, n_pad, 1), jnp.float32),   # softmax denominator acc
                pltpu.VMEM((bb, n_pad, 1), jnp.float32),   # pooled numerator acc
            ],
        ),
        compiler_params=pltpu.CompilerParams(
            dimension_semantics=("parallel", "arbitrary"),  # batch across cores,
            vmem_limit_bytes=vmem_limit),                   # T streamed/accumulated
    )


def att_block(x, w_att, b_att, w_cla, b_cla, *,
              matmul_dtype=jnp.bfloat16, out_dtype=jnp.bfloat16,
              t_tile=None, max_batch_block=8):
    """AttBlock forward.  x: (B, n_in, T).

    Returns (out (B, n_out) f32, norm_att (B, n_out, T), cla (B, n_out, T)),
    norm_att/cla in `out_dtype` (bf16 by default: halves the dominant HBM write
    streams).  `matmul_dtype` feeds the MXU (bf16 by default, f32 accumulation);
    pass None to keep the input dtype.  `t_tile` optionally forces the T tile
    (multiple of 128 that divides the padded T).
    """
    B, n_in, T = x.shape
    n_out = w_att.shape[0]
    out_dtype = jnp.dtype(out_dtype)

    # n_out padded to a multiple of 16: bf16 sublane packing stays tile-aligned
    # and the in-kernel att/cla row split is aligned.  T padded to a multiple of
    # 128 so T (the lane axis of every big tensor) is lane-dense.
    n_pad = _round_up(n_out, 16)
    T_pad = _round_up(T, 128)

    def pad_rows(a):
        return jnp.pad(a, ((0, n_pad - a.shape[0]),) + ((0, 0),) * (a.ndim - 1))

    # Fuse the two 1x1 convs into one weight / one bias (one MXU pass per tile).
    w_f = jnp.concatenate([pad_rows(w_att), pad_rows(w_cla)], axis=0)       # (2*n_pad, n_in)
    b_f = jnp.concatenate([pad_rows(b_att), pad_rows(b_cla)], axis=0)
    b_f = b_f[:, None].astype(jnp.float32)                                  # (2*n_pad, 1)

    if T_pad != T:
        x = jnp.pad(x, ((0, 0), (0, 0), (0, T_pad - T)))
    if matmul_dtype is not None:
        x = x.astype(matmul_dtype)
        w_f = w_f.astype(matmul_dtype)

    mm_isz = jnp.dtype(x.dtype).itemsize
    out_isz = out_dtype.itemsize

    # Per-generation VMEM cap with headroom below physical VMEM
    # (~48 MiB on v7x's 64 MiB, ~96 MiB on v5e/v6e's 128 MiB physical).
    vmem_limit = max(32 * 2 ** 20, int(0.75 * _vmem_capacity_bytes()))
    budget = int(0.9 * vmem_limit)

    def footprint(bb, tt):
        f32 = 4
        return (2 * bb * n_in * tt * mm_isz              # x block, double-buffered
                + (2 * n_pad) * n_in * mm_isz            # fused weights (single copy)
                + 2 * (2 * n_pad) * 128 * f32            # bias (lane-padded)
                + 2 * 2 * bb * n_pad * tt * out_isz      # natt + cla blocks, dbl-buffered
                + 6 * bb * n_pad * 128 * f32             # out/inv blocks + accumulators
                + 6 * bb * n_pad * tt * f32)             # f32 temporaries (y, e, cla, ...)

    # T tile: largest 128-multiple divisor of T_pad whose per-step footprint fits.
    if t_tile is None:
        t_tile = 128
        n128 = T_pad // 128
        for d in range(1, n128 + 1):
            if n128 % d == 0 and footprint(1, 128 * d) <= budget:
                t_tile = max(t_tile, 128 * d)
    else:
        if t_tile % 128 != 0 or T_pad % t_tile != 0:
            raise ValueError("t_tile must be a multiple of 128 dividing the padded T")

    # Batch block: amortize the per-grid-step overhead when per-batch work is small.
    bb = 1
    for d in range(1, min(B, max_batch_block) + 1):
        if B % d == 0 and footprint(d, t_tile) <= budget:
            bb = d

    num_t = T_pad // t_tile
    normalize_in_kernel = (num_t == 1)
    needs_mask = (T_pad != T)

    common = dict(B=B, n_in=n_in, T_pad=T_pad, n_pad=n_pad, bb=bb, t_tile=t_tile,
                  out_dtype=out_dtype, t_valid=T, needs_mask=needs_mask,
                  normalize_in_kernel=normalize_in_kernel, vmem_limit=vmem_limit)
    try:
        # Constant-index weights/bias single-buffered (frees a duplicate VMEM copy).
        call = _build_call(single_buffer_weights=True, **common)
        out_p, natt_p, cla_p, inv_p = call(x, w_f, b_f)
    except Exception:
        # This JAX/Mosaic build rejected pl.Buffered(1): use default double-buffering.
        call = _build_call(single_buffer_weights=False, **common)
        out_p, natt_p, cla_p, inv_p = call(x, w_f, b_f)

    if not normalize_in_kernel:
        # Cheap second pass: rescale the streamed exp(.) by the final 1/denominator.
        natt_p = (natt_p.astype(jnp.float32) * inv_p).astype(out_dtype)

    out = out_p[:, :n_out, 0]
    norm_att = natt_p[:, :n_out, :T]
    cla = cla_p[:, :n_out, :T]
    return out, norm_att, cla


def att_block_ref(x, w_att, b_att, w_cla, b_cla):
    """Pure-JAX reference matching the PyTorch forward."""
    att = jnp.einsum("oi,bit->bot", w_att, x) + b_att[None, :, None]
    att = jnp.clip(att, -10.0, 10.0)
    norm_att = jax.nn.softmax(att, axis=-1)
    cla = jax.nn.sigmoid(jnp.einsum("oi,bit->bot", w_cla, x) + b_cla[None, :, None])
    return jnp.sum(norm_att * cla, axis=2), norm_att, cla


if __name__ == "__main__":
    B, n_in, n_out, T = 2, 32, 8, 16

    key = jax.random.PRNGKey(0)
    kx, k1, k2, k3, k4 = jax.random.split(key, 5)

    x = jax.random.normal(kx, (B, n_in, T), dtype=jnp.float32)
    # deterministic "conv1d k=1" params (PyTorch-style uniform fan-in init)
    bound = 1.0 / (n_in ** 0.5)
    w_att = jax.random.uniform(k1, (n_out, n_in), jnp.float32, -bound, bound)
    b_att = jax.random.uniform(k2, (n_out,), jnp.float32, -bound, bound)
    w_cla = jax.random.uniform(k3, (n_out, n_in), jnp.float32, -bound, bound)
    b_cla = jax.random.uniform(k4, (n_out,), jnp.float32, -bound, bound)

    ro, rn, rc = att_block_ref(x, w_att, b_att, w_cla, b_cla)

    # 1) strict f32 path (single T tile, normalization fully in-kernel)
    out, natt, cla = att_block(x, w_att, b_att, w_cla, b_cla,
                               matmul_dtype=None, out_dtype=jnp.float32)
    jax.block_until_ready((out, natt, cla))
    assert jnp.allclose(out, ro, atol=1e-5, rtol=1e-5)
    assert jnp.allclose(natt, rn, atol=1e-5, rtol=1e-5)
    assert jnp.allclose(cla, rc, atol=1e-5, rtol=1e-5)

    # 2) default fast path: bf16 MXU feed + bf16 norm_att/cla outputs
    out_bf, natt_bf, cla_bf = att_block(x, w_att, b_att, w_cla, b_cla)
    jax.block_until_ready((out_bf, natt_bf, cla_bf))
    assert jnp.allclose(out_bf, ro, atol=5e-2, rtol=5e-2)
    assert jnp.allclose(natt_bf.astype(jnp.float32), rn, atol=5e-2, rtol=5e-2)
    assert jnp.allclose(cla_bf.astype(jnp.float32), rc, atol=5e-2, rtol=5e-2)

    # 3) streaming T-tiled path (multiple T tiles + wrapper renormalization), f32 strict
    T2 = 300
    x2 = jax.random.normal(jax.random.PRNGKey(1), (B, n_in, T2), dtype=jnp.float32)
    ro2, rn2, rc2 = att_block_ref(x2, w_att, b_att, w_cla, b_cla)
    out2, natt2, cla2 = att_block(x2, w_att, b_att, w_cla, b_cla,
                                  matmul_dtype=None, out_dtype=jnp.float32,
                                  t_tile=128)
    jax.block_until_ready((out2, natt2, cla2))
    assert jnp.allclose(out2, ro2, atol=1e-5, rtol=1e-5)
    assert jnp.allclose(natt2, rn2, atol=1e-5, rtol=1e-5)
    assert jnp.allclose(cla2, rc2, atol=1e-5, rtol=1e-5)

    print("KERNEL_OK")
</pallas_src>

<mosaic_0001>
module attributes {stable_mosaic.version = 11 : i64} {
  func.func @_attblock_kernel(%arg0: i32, %arg1: i32, %arg2: memref<2x32x128xf32, #tpu.memory_space<vmem>>, %arg3: memref<32x32xf32, #tpu.memory_space<vmem>>, %arg4: memref<32x1xf32, #tpu.memory_space<vmem>>, %arg5: memref<2x16x1xf32, #tpu.memory_space<vmem>>, %arg6: memref<2x16x128xf32, #tpu.memory_space<vmem>>, %arg7: memref<2x16x128xf32, #tpu.memory_space<vmem>>, %arg8: memref<2x16x1xf32, #tpu.memory_space<vmem>>, %arg9: memref<2x16x1xf32, #tpu.memory_space<vmem>>, %arg10: memref<2x16x1xf32, #tpu.memory_space<vmem>>) attributes {dimension_semantics = [#tpu.dimension_semantics<parallel>, #tpu.dimension_semantics<arbitrary>], iteration_bounds = array<i64: 1, 1>, scalar_prefetch = 0 : i64, scratch_operands = 2 : i64, tpu.core_type = #tpu.core_type<tc>, window_params = [{transform_indices = @transform_0, window_bounds = array<i64: 2, 32, 128>}, {pipeline_mode = #tpu.pipeline_mode<synchronous>, transform_indices = @transform_1, window_bounds = array<i64: 32, 32>}, {pipeline_mode = #tpu.pipeline_mode<synchronous>, transform_indices = @transform_2, window_bounds = array<i64: 32, 1>}, {transform_indices = @transform_3, window_bounds = array<i64: 2, 16, 1>}, {transform_indices = @transform_4, window_bounds = array<i64: 2, 16, 128>}, {transform_indices = @transform_5, window_bounds = array<i64: 2, 16, 128>}, {transform_indices = @transform_6, window_bounds = array<i64: 2, 16, 1>}]} {
    %c0_i32 = arith.constant 0 : i32
    %0 = arith.cmpi eq, %arg1, %c0_i32 : i32
    %1 = arith.extui %0 : i1 to i32
    %c0_i32_0 = arith.constant 0 : i32
    %2 = arith.cmpi ne, %1, %c0_i32_0 : i32
    scf.if %2 {
      %cst_68 = arith.constant 0.000000e+00 : f32
      %112 = vector.broadcast %cst_68 : f32 to vector<2x16x1xf32>
      %c0_69 = arith.constant 0 : index
      %c0_70 = arith.constant 0 : index
      %c0_71 = arith.constant 0 : index
      %113 = vector.load %arg9[%c0_69, %c0_70, %c0_71] : memref<2x16x1xf32, #tpu.memory_space<vmem>>, vector<2x16x1xf32>
      tpu.vector_store %arg9[%c0_69, %c0_70, %c0_71], %112 {strides = array<i32>} : memref<2x16x1xf32, #tpu.memory_space<vmem>>, vector<2x16x1xf32>,
      %cst_72 = arith.constant 0.000000e+00 : f32
      %114 = vector.broadcast %cst_72 : f32 to vector<2x16x1xf32>
      %c0_73 = arith.constant 0 : index
      %c0_74 = arith.constant 0 : index
      %c0_75 = arith.constant 0 : index
      %115 = vector.load %arg10[%c0_73, %c0_74, %c0_75] : memref<2x16x1xf32, #tpu.memory_space<vmem>>, vector<2x16x1xf32>
      tpu.vector_store %arg10[%c0_73, %c0_74, %c0_75], %114 {strides = array<i32>} : memref<2x16x1xf32, #tpu.memory_space<vmem>>, vector<2x16x1xf32>,
    } else {
    }
    %c0 = arith.constant 0 : index
    %c0_1 = arith.constant 0 : index
    %3 = vector.load %arg3[%c0, %c0_1] : memref<32x32xf32, #tpu.memory_space<vmem>>, vector<32x32xf32>
    %c0_2 = arith.constant 0 : index
    %c0_3 = arith.constant 0 : index
    %4 = vector.load %arg4[%c0_2, %c0_3] : memref<32x1xf32, #tpu.memory_space<vmem>>, vector<32x1xf32>
    %5 = tpu.iota {dimensions = array<i32: 1>} : vector<16x128xi32>
    %c128_i32 = arith.constant 128 : i32
    %6 = arith.muli %arg1, %c128_i32 : i32
    %7 = vector.broadcast %6 : i32 to vector<16x128xi32>
    %8 = arith.addi %5, %7 : vector<16x128xi32>
    %c16_i32 = arith.constant 16 : i32
    %9 = vector.broadcast %c16_i32 : i32 to vector<16x128xi32>
    %10 = arith.cmpi slt, %8, %9 : vector<16x128xi32>
    %c0_4 = arith.constant 0 : index
    %c0_5 = arith.constant 0 : index
    %c0_6 = arith.constant 0 : index
    %11 = vector.load %arg2[%c0_4, %c0_5, %c0_6] : memref<2x32x128xf32, #tpu.memory_space<vmem>>, vector<1x32x128xf32>
    %12 = vector.shape_cast %11 : vector<1x32x128xf32> to vector<32x128xf32>
    %cst = arith.constant dense<0.000000e+00> : vector<32x128xf32>
    %13 = tpu.matmul %3, %12, %cst {dimension_numbers = #tpu.dot_dimension_numbers<[1], [0], [0], [1], [0, 0, 1, 1], [], []>} : vector<32x32xf32>, vector<32x128xf32>, vector<32x128xf32> -> vector<32x128xf32>
    %14 = vector.broadcast %4 : vector<32x1xf32> to vector<32x128xf32>
    %15 = arith.addf %13, %14 : vector<32x128xf32>
    %16 = vector.extract_strided_slice %15 {offsets = [0, 0], sizes = [16, 128], strides = [1, 1]} : vector<32x128xf32> to vector<16x128xf32>
    %cst_7 = arith.constant -1.000000e+01 : f32
    %cst_8 = arith.constant 1.000000e+01 : f32
    %17 = vector.broadcast %cst_7 : f32 to vector<16x128xf32>
    %18 = arith.maximumf %17, %16 : vector<16x128xf32>
    %19 = vector.broadcast %cst_8 : f32 to vector<16x128xf32>
    %20 = arith.minimumf %19, %18 : vector<16x128xf32>
    %cst_9 = arith.constant 1.000000e+01 : f32
    %21 = vector.broadcast %cst_9 : f32 to vector<16x128xf32>
    %22 = arith.subf %20, %21 : vector<16x128xf32>
    %23 = math.exp %22 : vector<16x128xf32>
    %cst_10 = arith.constant 0.000000e+00 : f32
    %24 = vector.broadcast %cst_10 : f32 to vector<16x128xf32>
    %25 = arith.select %10, %23, %24 : vector<16x128xi1>, vector<16x128xf32>
    %26 = vector.extract_strided_slice %15 {offsets = [16, 0], sizes = [16, 128], strides = [1, 1]} : vector<32x128xf32> to vector<16x128xf32>
    %27 = arith.negf %26 : vector<16x128xf32>
    %28 = math.exp %27 : vector<16x128xf32>
    %cst_11 = arith.constant 1.000000e+00 : f32
    %29 = vector.broadcast %cst_11 : f32 to vector<16x128xf32>
    %30 = arith.addf %29, %28 : vector<16x128xf32>
    %31 = arith.divf %29, %30 : vector<16x128xf32>
    %c0_12 = arith.constant 0 : index
    %c0_13 = arith.constant 0 : index
    %c0_14 = arith.constant 0 : index
    %32 = vector.load %arg9[%c0_12, %c0_13, %c0_14] : memref<2x16x1xf32, #tpu.memory_space<vmem>>, vector<1x16x1xf32>
    %33 = vector.shape_cast %32 : vector<1x16x1xf32> to vector<16x1xf32>
    %cst_15 = arith.constant dense<0.000000e+00> : vector<16xf32>
    %34 = vector.multi_reduction <add>, %25, %cst_15 [1] : vector<16x128xf32> to vector<16xf32>
    %35 = vector.shape_cast %34 : vector<16xf32> to vector<16x1xf32>
    %36 = arith.addf %33, %35 : vector<16x1xf32>
    %c0_16 = arith.constant 0 : index
    %c0_17 = arith.constant 0 : index
    %c0_18 = arith.constant 0 : index
    %37 = vector.load %arg9[%c0_16, %c0_17, %c0_18] : memref<2x16x1xf32, #tpu.memory_space<vmem>>, vector<1x16x1xf32>
    %38 = vector.shape_cast %37 : vector<1x16x1xf32> to vector<16x1xf32>
    %39 = vector.shape_cast %36 : vector<16x1xf32> to vector<1x16x1xf32>
    tpu.vector_store %arg9[%c0_16, %c0_17, %c0_18], %39 {strides = array<i32>} : memref<2x16x1xf32, #tpu.memory_space<vmem>>, vector<1x16x1xf32>,
    %c0_19 = arith.constant 0 : index
    %c0_20 = arith.constant 0 : index
    %c0_21 = arith.constant 0 : index
    %40 = vector.load %arg10[%c0_19, %c0_20, %c0_21] : memref<2x16x1xf32, #tpu.memory_space<vmem>>, vector<1x16x1xf32>
    %41 = vector.shape_cast %40 : vector<1x16x1xf32> to vector<16x1xf32>
    %42 = arith.mulf %25, %31 : vector<16x128xf32>
    %cst_22 = arith.constant dense<0.000000e+00> : vector<16xf32>
    %43 = vector.multi_reduction <add>, %42, %cst_22 [1] : vector<16x128xf32> to vector<16xf32>
    %44 = vector.shape_cast %43 : vector<16xf32> to vector<16x1xf32>
    %45 = arith.addf %41, %44 : vector<16x1xf32>
    %c0_23 = arith.constant 0 : index
    %c0_24 = arith.constant 0 : index
    %c0_25 = arith.constant 0 : index
    %46 = vector.load %arg10[%c0_23, %c0_24, %c0_25] : memref<2x16x1xf32, #tpu.memory_space<vmem>>, vector<1x16x1xf32>
    %47 = vector.shape_cast %46 : vector<1x16x1xf32> to vector<16x1xf32>
    %48 = vector.shape_cast %45 : vector<16x1xf32> to vector<1x16x1xf32>
    tpu.vector_store %arg10[%c0_23, %c0_24, %c0_25], %48 {strides = array<i32>} : memref<2x16x1xf32, #tpu.memory_space<vmem>>, vector<1x16x1xf32>,
    %c0_26 = arith.constant 0 : index
    %c0_27 = arith.constant 0 : index
    %c0_28 = arith.constant 0 : index
    %49 = vector.load %arg7[%c0_26, %c0_27, %c0_28] : memref<2x16x128xf32, #tpu.memory_space<vmem>>, vector<1x16x128xf32>
    %50 = vector.shape_cast %49 : vector<1x16x128xf32> to vector<16x128xf32>
    %51 = vector.shape_cast %31 : vector<16x128xf32> to vector<1x16x128xf32>
    tpu.vector_store %arg7[%c0_26, %c0_27, %c0_28], %51 {strides = array<i32>} : memref<2x16x128xf32, #tpu.memory_space<vmem>>, vector<1x16x128xf32>,
    %c0_29 = arith.constant 0 : index
    %c0_30 = arith.constant 0 : index
    %c0_31 = arith.constant 0 : index
    %52 = vector.load %arg9[%c0_29, %c0_30, %c0_31] : memref<2x16x1xf32, #tpu.memory_space<vmem>>, vector<1x16x1xf32>
    %53 = vector.shape_cast %52 : vector<1x16x1xf32> to vector<16x1xf32>
    %54 = tpu.reciprocal %53 : vector<16x1xf32> -> vector<16x1xf32>
    %55 = vector.broadcast %54 : vector<16x1xf32> to vector<16x128xf32>
    %56 = arith.mulf %25, %55 : vector<16x128xf32>
    %c0_32 = arith.constant 0 : index
    %c0_33 = arith.constant 0 : index
    %c0_34 = arith.constant 0 : index
    %57 = vector.load %arg6[%c0_32, %c0_33, %c0_34] : memref<2x16x128xf32, #tpu.memory_space<vmem>>, vector<1x16x128xf32>
    %58 = vector.shape_cast %57 : vector<1x16x128xf32> to vector<16x128xf32>
    %59 = vector.shape_cast %56 : vector<16x128xf32> to vector<1x16x128xf32>
    tpu.vector_store %arg6[%c0_32, %c0_33, %c0_34], %59 {strides = array<i32>} : memref<2x16x128xf32, #tpu.memory_space<vmem>>, vector<1x16x128xf32>,
    %c1 = arith.constant 1 : index
    %c0_35 = arith.constant 0 : index
    %c0_36 = arith.constant 0 : index
    %60 = vector.load %arg2[%c1, %c0_35, %c0_36] : memref<2x32x128xf32, #tpu.memory_space<vmem>>, vector<1x32x128xf32>
    %61 = vector.shape_cast %60 : vector<1x32x128xf32> to vector<32x128xf32>
    %cst_37 = arith.constant dense<0.000000e+00> : vector<32x128xf32>
    %62 = tpu.matmul %3, %61, %cst_37 {dimension_numbers = #tpu.dot_dimension_numbers<[1], [0], [0], [1], [0, 0, 1, 1], [], []>} : vector<32x32xf32>, vector<32x128xf32>, vector<32x128xf32> -> vector<32x128xf32>
    %63 = vector.broadcast %4 : vector<32x1xf32> to vector<32x128xf32>
    %64 = arith.addf %62, %63 : vector<32x128xf32>
    %65 = vector.extract_strided_slice %64 {offsets = [0, 0], sizes = [16, 128], strides = [1, 1]} : vector<32x128xf32> to vector<16x128xf32>
    %cst_38 = arith.constant -1.000000e+01 : f32
    %cst_39 = arith.constant 1.000000e+01 : f32
    %66 = vector.broadcast %cst_38 : f32 to vector<16x128xf32>
    %67 = arith.maximumf %66, %65 : vector<16x128xf32>
    %68 = vector.broadcast %cst_39 : f32 to vector<16x128xf32>
    %69 = arith.minimumf %68, %67 : vector<16x128xf32>
    %cst_40 = arith.constant 1.000000e+01 : f32
    %70 = vector.broadcast %cst_40 : f32 to vector<16x128xf32>
    %71 = arith.subf %69, %70 : vector<16x128xf32>
    %72 = math.exp %71 : vector<16x128xf32>
    %cst_41 = arith.constant 0.000000e+00 : f32
    %73 = vector.broadcast %cst_41 : f32 to vector<16x128xf32>
    %74 = arith.select %10, %72, %73 : vector<16x128xi1>, vector<16x128xf32>
    %75 = vector.extract_strided_slice %64 {offsets = [16, 0], sizes = [16, 128], strides = [1, 1]} : vector<32x128xf32> to vector<16x128xf32>
    %76 = arith.negf %75 : vector<16x128xf32>
    %77 = math.exp %76 : vector<16x128xf32>
    %cst_42 = arith.constant 1.000000e+00 : f32
    %78 = vector.broadcast %cst_42 : f32 to vector<16x128xf32>
    %79 = arith.addf %78, %77 : vector<16x128xf32>
    %80 = arith.divf %78, %79 : vector<16x128xf32>
    %c1_43 = arith.constant 1 : index
    %c0_44 = arith.constant 0 : index
    %c0_45 = arith.constant 0 : index
    %81 = vector.load %arg9[%c1_43, %c0_44, %c0_45] : memref<2x16x1xf32, #tpu.memory_space<vmem>>, vector<1x16x1xf32>
    %82 = vector.shape_cast %81 : vector<1x16x1xf32> to vector<16x1xf32>
    %cst_46 = arith.constant dense<0.000000e+00> : vector<16xf32>
    %83 = vector.multi_reduction <add>, %74, %cst_46 [1] : vector<16x128xf32> to vector<16xf32>
    %84 = vector.shape_cast %83 : vector<16xf32> to vector<16x1xf32>
    %85 = arith.addf %82, %84 : vector<16x1xf32>
    %c1_47 = arith.constant 1 : index
    %c0_48 = arith.constant 0 : index
    %c0_49 = arith.constant 0 : index
    %86 = vector.load %arg9[%c1_47, %c0_48, %c0_49] : memref<2x16x1xf32, #tpu.memory_space<vmem>>, vector<1x16x1xf32>
    %87 = vector.shape_cast %86 : vector<1x16x1xf32> to vector<16x1xf32>
    %88 = vector.shape_cast %85 : vector<16x1xf32> to vector<1x16x1xf32>
    tpu.vector_store %arg9[%c1_47, %c0_48, %c0_49], %88 {strides = array<i32>} : memref<2x16x1xf32, #tpu.memory_space<vmem>>, vector<1x16x1xf32>,
    %c1_50 = arith.constant 1 : index
    %c0_51 = arith.constant 0 : index
    %c0_52 = arith.constant 0 : index
    %89 = vector.load %arg10[%c1_50, %c0_51, %c0_52] : memref<2x16x1xf32, #tpu.memory_space<vmem>>, vector<1x16x1xf32>
    %90 = vector.shape_cast %89 : vector<1x16x1xf32> to vector<16x1xf32>
    %91 = arith.mulf %74, %80 : vector<16x128xf32>
    %cst_53 = arith.constant dense<0.000000e+00> : vector<16xf32>
    %92 = vector.multi_reduction <add>, %91, %cst_53 [1] : vector<16x128xf32> to vector<16xf32>
    %93 = vector.shape_cast %92 : vector<16xf32> to vector<16x1xf32>
    %94 = arith.addf %90, %93 : vector<16x1xf32>
    %c1_54 = arith.constant 1 : index
    %c0_55 = arith.constant 0 : index
    %c0_56 = arith.constant 0 : index
    %95 = vector.load %arg10[%c1_54, %c0_55, %c0_56] : memref<2x16x1xf32, #tpu.memory_space<vmem>>, vector<1x16x1xf32>
    %96 = vector.shape_cast %95 : vector<1x16x1xf32> to vector<16x1xf32>
    %97 = vector.shape_cast %94 : vector<16x1xf32> to vector<1x16x1xf32>
    tpu.vector_store %arg10[%c1_54, %c0_55, %c0_56], %97 {strides = array<i32>} : memref<2x16x1xf32, #tpu.memory_space<vmem>>, vector<1x16x1xf32>,
    %c1_57 = arith.constant 1 : index
    %c0_58 = arith.constant 0 : index
    %c0_59 = arith.constant 0 : index
    %98 = vector.load %arg7[%c1_57, %c0_58, %c0_59] : memref<2x16x128xf32, #tpu.memory_space<vmem>>, vector<1x16x128xf32>
    %99 = vector.shape_cast %98 : vector<1x16x128xf32> to vector<16x128xf32>
    %100 = vector.shape_cast %80 : vector<16x128xf32> to vector<1x16x128xf32>
    tpu.vector_store %arg7[%c1_57, %c0_58, %c0_59], %100 {strides = array<i32>} : memref<2x16x128xf32, #tpu.memory_space<vmem>>, vector<1x16x128xf32>,
    %c1_60 = arith.constant 1 : index
    %c0_61 = arith.constant 0 : index
    %c0_62 = arith.constant 0 : index
    %101 = vector.load %arg9[%c1_60, %c0_61, %c0_62] : memref<2x16x1xf32, #tpu.memory_space<vmem>>, vector<1x16x1xf32>
    %102 = vector.shape_cast %101 : vector<1x16x1xf32> to vector<16x1xf32>
    %103 = tpu.reciprocal %102 : vector<16x1xf32> -> vector<16x1xf32>
    %104 = vector.broadcast %103 : vector<16x1xf32> to vector<16x128xf32>
    %105 = arith.mulf %74, %104 : vector<16x128xf32>
    %c1_63 = arith.constant 1 : index
    %c0_64 = arith.constant 0 : index
    %c0_65 = arith.constant 0 : index
    %106 = vector.load %arg6[%c1_63, %c0_64, %c0_65] : memref<2x16x128xf32, #tpu.memory_space<vmem>>, vector<1x16x128xf32>
    %107 = vector.shape_cast %106 : vector<1x16x128xf32> to vector<16x128xf32>
    %108 = vector.shape_cast %105 : vector<16x128xf32> to vector<1x16x128xf32>
    tpu.vector_store %arg6[%c1_63, %c0_64, %c0_65], %108 {strides = array<i32>} : memref<2x16x128xf32, #tpu.memory_space<vmem>>, vector<1x16x128xf32>,
    %c0_i32_66 = arith.constant 0 : i32
    %109 = arith.cmpi eq, %arg1, %c0_i32_66 : i32
    %110 = arith.extui %109 : i1 to i32
    %c0_i32_67 = arith.constant 0 : i32
    %111 = arith.cmpi ne, %110, %c0_i32_67 : i32
    scf.if %111 {
      %c0_68 = arith.constant 0 : index
      %c0_69 = arith.constant 0 : index
      %c0_70 = arith.constant 0 : index
      %112 = vector.load %arg9[%c0_68, %c0_69, %c0_70] : memref<2x16x1xf32, #tpu.memory_space<vmem>>, vector<2x16x1xf32>
      %113 = tpu.reciprocal %112 : vector<2x16x1xf32> -> vector<2x16x1xf32>
      %c0_71 = arith.constant 0 : index
      %c0_72 = arith.constant 0 : index
      %c0_73 = arith.constant 0 : index
      %114 = vector.load %arg10[%c0_71, %c0_72, %c0_73] : memref<2x16x1xf32, #tpu.memory_space<vmem>>, vector<2x16x1xf32>
      %115 = arith.mulf %114, %113 : vector<2x16x1xf32>
      %c0_74 = arith.constant 0 : index
      %c0_75 = arith.constant 0 : index
      %c0_76 = arith.constant 0 : index
      %116 = vector.load %arg5[%c0_74, %c0_75, %c0_76] : memref<2x16x1xf32, #tpu.memory_space<vmem>>, vector<2x16x1xf32>
      tpu.vector_store %arg5[%c0_74, %c0_75, %c0_76], %115 {strides = array<i32>} : memref<2x16x1xf32, #tpu.memory_space<vmem>>, vector<2x16x1xf32>,
      %c0_77 = arith.constant 0 : index
      %c0_78 = arith.constant 0 : index
      %c0_79 = arith.constant 0 : index
      %117 = vector.load %arg8[%c0_77, %c0_78, %c0_79] : memref<2x16x1xf32, #tpu.memory_space<vmem>>, vector<2x16x1xf32>
      tpu.vector_store %arg8[%c0_77, %c0_78, %c0_79], %113 {strides = array<i32>} : memref<2x16x1xf32, #tpu.memory_space<vmem>>, vector<2x16x1xf32>,
    } else {
    }
    return
  }
  func.func @transform_0(%arg0: i32, %arg1: i32) -> (i32, i32, i32) {
    %c0_i32 = arith.constant 0 : i32
    %c0_i32_0 = arith.constant 0 : i32
    return %arg0, %c0_i32, %arg1 : i32, i32, i32
  }
  func.func @transform_1(%arg0: i32, %arg1: i32) -> (i32, i32) {
    %c0_i32 = arith.constant 0 : i32
    %c0_i32_0 = arith.constant 0 : i32
    %c0_i32_1 = arith.constant 0 : i32
    return %c0_i32, %c0_i32_0 : i32, i32
  }
  func.func @transform_2(%arg0: i32, %arg1: i32) -> (i32, i32) {
    %c0_i32 = arith.constant 0 : i32
    %c0_i32_0 = arith.constant 0 : i32
    %c0_i32_1 = arith.constant 0 : i32
    return %c0_i32, %c0_i32_0 : i32, i32
  }
  func.func @transform_3(%arg0: i32, %arg1: i32) -> (i32, i32, i32) {
    %c0_i32 = arith.constant 0 : i32
    %c0_i32_0 = arith.constant 0 : i32
    %c0_i32_1 = arith.constant 0 : i32
    return %arg0, %c0_i32, %c0_i32_0 : i32, i32, i32
  }
  func.func @transform_4(%arg0: i32, %arg1: i32) -> (i32, i32, i32) {
    %c0_i32 = arith.constant 0 : i32
    %c0_i32_0 = arith.constant 0 : i32
    return %arg0, %c0_i32, %arg1 : i32, i32, i32
  }
  func.func @transform_5(%arg0: i32, %arg1: i32) -> (i32, i32, i32) {
    %c0_i32 = arith.constant 0 : i32
    %c0_i32_0 = arith.constant 0 : i32
    return %arg0, %c0_i32, %arg1 : i32, i32, i32
  }
  func.func @transform_6(%arg0: i32, %arg1: i32) -> (i32, i32, i32) {
    %c0_i32 = arith.constant 0 : i32
    %c0_i32_0 = arith.constant 0 : i32
    %c0_i32_1 = arith.constant 0 : i32
    return %arg0, %c0_i32, %c0_i32_0 : i32, i32, i32
  }
}

module attributes {stable_mosaic.version = 11 : i64} {
  func.func @_attblock_kernel(%arg0: i32, %arg1: i32, %arg2: memref<2x32x128xf32, #tpu.memory_space<vmem>>, %arg3: memref<32x32xf32, #tpu.memory_space<vmem>>, %arg4: memref<32x1xf32, #tpu.memory_space<vmem>>, %arg5: memref<2x16x1xf32, #tpu.memory_space<vmem>>, %arg6: memref<2x16x128xf32, #tpu.memory_space<vmem>>, %arg7: memref<2x16x128xf32, #tpu.memory_space<vmem>>, %arg8: memref<2x16x1xf32, #tpu.memory_space<vmem>>, %arg9: memref<2x16x1xf32, #tpu.memory_space<vmem>>, %arg10: memref<2x16x1xf32, #tpu.memory_space<vmem>>) attributes {dimension_semantics = [#tpu.dimension_semantics<parallel>, #tpu.dimension_semantics<arbitrary>], iteration_bounds = array<i64: 1, 1>, scalar_prefetch = 0 : i64, scratch_operands = 2 : i64, tpu.core_type = #tpu.core_type<tc>, window_params = [{transform_indices = @transform_0, window_bounds = array<i64: 2, 32, 128>}, {pipeline_mode = #tpu.pipeline_mode<synchronous>, transform_indices = @transform_1, window_bounds = array<i64: 32, 32>}, {pipeline_mode = #tpu.pipeline_mode<synchronous>, transform_indices = @transform_2, window_bounds = array<i64: 32, 1>}, {transform_indices = @transform_3, window_bounds = array<i64: 2, 16, 1>}, {transform_indices = @transform_4, window_bounds = array<i64: 2, 16, 128>}, {transform_indices = @transform_5, window_bounds = array<i64: 2, 16, 128>}, {transform_indices = @transform_6, window_bounds = array<i64: 2, 16, 1>}]} {
    %c0_i32 = arith.constant 0 : i32
    %0 = arith.cmpi eq, %arg1, %c0_i32 : i32
    %1 = arith.extui %0 : i1 to i32
    %c0_i32_0 = arith.constant 0 : i32
    %2 = arith.cmpi ne, %1, %c0_i32_0 : i32
    scf.if %2 {
      %cst_68 = arith.constant 0.000000e+00 : f32
      %112 = vector.broadcast %cst_68 : f32 to vector<2x16x1xf32>
      %c0_69 = arith.constant 0 : index
      %c0_70 = arith.constant 0 : index
      %c0_71 = arith.constant 0 : index
      %113 = vector.load %arg9[%c0_69, %c0_70, %c0_71] : memref<2x16x1xf32, #tpu.memory_space<vmem>>, vector<2x16x1xf32>
      tpu.vector_store %arg9[%c0_69, %c0_70, %c0_71], %112 {strides = array<i32>} : memref<2x16x1xf32, #tpu.memory_space<vmem>>, vector<2x16x1xf32>,
      %cst_72 = arith.constant 0.000000e+00 : f32
      %114 = vector.broadcast %cst_72 : f32 to vector<2x16x1xf32>
      %c0_73 = arith.constant 0 : index
      %c0_74 = arith.constant 0 : index
      %c0_75 = arith.constant 0 : index
      %115 = vector.load %arg10[%c0_73, %c0_74, %c0_75] : memref<2x16x1xf32, #tpu.memory_space<vmem>>, vector<2x16x1xf32>
      tpu.vector_store %arg10[%c0_73, %c0_74, %c0_75], %114 {strides = array<i32>} : memref<2x16x1xf32, #tpu.memory_space<vmem>>, vector<2x16x1xf32>,
    } else {
    }
    %c0 = arith.constant 0 : index
    %c0_1 = arith.constant 0 : index
    %3 = vector.load %arg3[%c0, %c0_1] : memref<32x32xf32, #tpu.memory_space<vmem>>, vector<32x32xf32>
    %c0_2 = arith.constant 0 : index
    %c0_3 = arith.constant 0 : index
    %4 = vector.load %arg4[%c0_2, %c0_3] : memref<32x1xf32, #tpu.memory_space<vmem>>, vector<32x1xf32>
    %5 = tpu.iota {dimensions = array<i32: 1>} : vector<16x128xi32>
    %c128_i32 = arith.constant 128 : i32
    %6 = arith.muli %arg1, %c128_i32 : i32
    %7 = vector.broadcast %6 : i32 to vector<16x128xi32>
    %8 = arith.addi %5, %7 : vector<16x128xi32>
    %c16_i32 = arith.constant 16 : i32
    %9 = vector.broadcast %c16_i32 : i32 to vector<16x128xi32>
    %10 = arith.cmpi slt, %8, %9 : vector<16x128xi32>
    %c0_4 = arith.constant 0 : index
    %c0_5 = arith.constant 0 : index
    %c0_6 = arith.constant 0 : index
    %11 = vector.load %arg2[%c0_4, %c0_5, %c0_6] : memref<2x32x128xf32, #tpu.memory_space<vmem>>, vector<1x32x128xf32>
    %12 = vector.shape_cast %11 : vector<1x32x128xf32> to vector<32x128xf32>
    %cst = arith.constant dense<0.000000e+00> : vector<32x128xf32>
    %13 = tpu.matmul %3, %12, %cst {dimension_numbers = #tpu.dot_dimension_numbers<[1], [0], [0], [1], [0, 0, 1, 1], [], []>} : vector<32x32xf32>, vector<32x128xf32>, vector<32x128xf32> -> vector<32x128xf32>
    %14 = vector.broadcast %4 : vector<32x1xf32> to vector<32x128xf32>
    %15 = arith.addf %13, %14 : vector<32x128xf32>
    %16 = vector.extract_strided_slice %15 {offsets = [0, 0], sizes = [16, 128], strides = [1, 1]} : vector<32x128xf32> to vector<16x128xf32>
    %cst_7 = arith.constant -1.000000e+01 : f32
    %cst_8 = arith.constant 1.000000e+01 : f32
    %17 = vector.broadcast %cst_7 : f32 to vector<16x128xf32>
    %18 = arith.maximumf %17, %16 : vector<16x128xf32>
    %19 = vector.broadcast %cst_8 : f32 to vector<16x128xf32>
    %20 = arith.minimumf %19, %18 : vector<16x128xf32>
    %cst_9 = arith.constant 1.000000e+01 : f32
    %21 = vector.broadcast %cst_9 : f32 to vector<16x128xf32>
    %22 = arith.subf %20, %21 : vector<16x128xf32>
    %23 = math.exp %22 : vector<16x128xf32>
    %cst_10 = arith.constant 0.000000e+00 : f32
    %24 = vector.broadcast %cst_10 : f32 to vector<16x128xf32>
    %25 = arith.select %10, %23, %24 : vector<16x128xi1>, vector<16x128xf32>
    %26 = vector.extract_strided_slice %15 {offsets = [16, 0], sizes = [16, 128], strides = [1, 1]} : vector<32x128xf32> to vector<16x128xf32>
    %27 = arith.negf %26 : vector<16x128xf32>
    %28 = math.exp %27 : vector<16x128xf32>
    %cst_11 = arith.constant 1.000000e+00 : f32
    %29 = vector.broadcast %cst_11 : f32 to vector<16x128xf32>
    %30 = arith.addf %29, %28 : vector<16x128xf32>
    %31 = arith.divf %29, %30 : vector<16x128xf32>
    %c0_12 = arith.constant 0 : index
    %c0_13 = arith.constant 0 : index
    %c0_14 = arith.constant 0 : index
    %32 = vector.load %arg9[%c0_12, %c0_13, %c0_14] : memref<2x16x1xf32, #tpu.memory_space<vmem>>, vector<1x16x1xf32>
    %33 = vector.shape_cast %32 : vector<1x16x1xf32> to vector<16x1xf32>
    %cst_15 = arith.constant dense<0.000000e+00> : vector<16xf32>
    %34 = vector.multi_reduction <add>, %25, %cst_15 [1] : vector<16x128xf32> to vector<16xf32>
    %35 = vector.shape_cast %34 : vector<16xf32> to vector<16x1xf32>
    %36 = arith.addf %33, %35 : vector<16x1xf32>
    %c0_16 = arith.constant 0 : index
    %c0_17 = arith.constant 0 : index
    %c0_18 = arith.constant 0 : index
    %37 = vector.load %arg9[%c0_16, %c0_17, %c0_18] : memref<2x16x1xf32, #tpu.memory_space<vmem>>, vector<1x16x1xf32>
    %38 = vector.shape_cast %37 : vector<1x16x1xf32> to vector<16x1xf32>
    %39 = vector.shape_cast %36 : vector<16x1xf32> to vector<1x16x1xf32>
    tpu.vector_store %arg9[%c0_16, %c0_17, %c0_18], %39 {strides = array<i32>} : memref<2x16x1xf32, #tpu.memory_space<vmem>>, vector<1x16x1xf32>,
    %c0_19 = arith.constant 0 : index
    %c0_20 = arith.constant 0 : index
    %c0_21 = arith.constant 0 : index
    %40 = vector.load %arg10[%c0_19, %c0_20, %c0_21] : memref<2x16x1xf32, #tpu.memory_space<vmem>>, vector<1x16x1xf32>
    %41 = vector.shape_cast %40 : vector<1x16x1xf32> to vector<16x1xf32>
    %42 = arith.mulf %25, %31 : vector<16x128xf32>
    %cst_22 = arith.constant dense<0.000000e+00> : vector<16xf32>
    %43 = vector.multi_reduction <add>, %42, %cst_22 [1] : vector<16x128xf32> to vector<16xf32>
    %44 = vector.shape_cast %43 : vector<16xf32> to vector<16x1xf32>
    %45 = arith.addf %41, %44 : vector<16x1xf32>
    %c0_23 = arith.constant 0 : index
    %c0_24 = arith.constant 0 : index
    %c0_25 = arith.constant 0 : index
    %46 = vector.load %arg10[%c0_23, %c0_24, %c0_25] : memref<2x16x1xf32, #tpu.memory_space<vmem>>, vector<1x16x1xf32>
    %47 = vector.shape_cast %46 : vector<1x16x1xf32> to vector<16x1xf32>
    %48 = vector.shape_cast %45 : vector<16x1xf32> to vector<1x16x1xf32>
    tpu.vector_store %arg10[%c0_23, %c0_24, %c0_25], %48 {strides = array<i32>} : memref<2x16x1xf32, #tpu.memory_space<vmem>>, vector<1x16x1xf32>,
    %c0_26 = arith.constant 0 : index
    %c0_27 = arith.constant 0 : index
    %c0_28 = arith.constant 0 : index
    %49 = vector.load %arg7[%c0_26, %c0_27, %c0_28] : memref<2x16x128xf32, #tpu.memory_space<vmem>>, vector<1x16x128xf32>
    %50 = vector.shape_cast %49 : vector<1x16x128xf32> to vector<16x128xf32>
    %51 = vector.shape_cast %31 : vector<16x128xf32> to vector<1x16x128xf32>
    tpu.vector_store %arg7[%c0_26, %c0_27, %c0_28], %51 {strides = array<i32>} : memref<2x16x128xf32, #tpu.memory_space<vmem>>, vector<1x16x128xf32>,
    %c0_29 = arith.constant 0 : index
    %c0_30 = arith.constant 0 : index
    %c0_31 = arith.constant 0 : index
    %52 = vector.load %arg9[%c0_29, %c0_30, %c0_31] : memref<2x16x1xf32, #tpu.memory_space<vmem>>, vector<1x16x1xf32>
    %53 = vector.shape_cast %52 : vector<1x16x1xf32> to vector<16x1xf32>
    %54 = tpu.reciprocal %53 : vector<16x1xf32> -> vector<16x1xf32>
    %55 = vector.broadcast %54 : vector<16x1xf32> to vector<16x128xf32>
    %56 = arith.mulf %25, %55 : vector<16x128xf32>
    %c0_32 = arith.constant 0 : index
    %c0_33 = arith.constant 0 : index
    %c0_34 = arith.constant 0 : index
    %57 = vector.load %arg6[%c0_32, %c0_33, %c0_34] : memref<2x16x128xf32, #tpu.memory_space<vmem>>, vector<1x16x128xf32>
    %58 = vector.shape_cast %57 : vector<1x16x128xf32> to vector<16x128xf32>
    %59 = vector.shape_cast %56 : vector<16x128xf32> to vector<1x16x128xf32>
    tpu.vector_store %arg6[%c0_32, %c0_33, %c0_34], %59 {strides = array<i32>} : memref<2x16x128xf32, #tpu.memory_space<vmem>>, vector<1x16x128xf32>,
    %c1 = arith.constant 1 : index
    %c0_35 = arith.constant 0 : index
    %c0_36 = arith.constant 0 : index
    %60 = vector.load %arg2[%c1, %c0_35, %c0_36] : memref<2x32x128xf32, #tpu.memory_space<vmem>>, vector<1x32x128xf32>
    %61 = vector.shape_cast %60 : vector<1x32x128xf32> to vector<32x128xf32>
    %cst_37 = arith.constant dense<0.000000e+00> : vector<32x128xf32>
    %62 = tpu.matmul %3, %61, %cst_37 {dimension_numbers = #tpu.dot_dimension_numbers<[1], [0], [0], [1], [0, 0, 1, 1], [], []>} : vector<32x32xf32>, vector<32x128xf32>, vector<32x128xf32> -> vector<32x128xf32>
    %63 = vector.broadcast %4 : vector<32x1xf32> to vector<32x128xf32>
    %64 = arith.addf %62, %63 : vector<32x128xf32>
    %65 = vector.extract_strided_slice %64 {offsets = [0, 0], sizes = [16, 128], strides = [1, 1]} : vector<32x128xf32> to vector<16x128xf32>
    %cst_38 = arith.constant -1.000000e+01 : f32
    %cst_39 = arith.constant 1.000000e+01 : f32
    %66 = vector.broadcast %cst_38 : f32 to vector<16x128xf32>
    %67 = arith.maximumf %66, %65 : vector<16x128xf32>
    %68 = vector.broadcast %cst_39 : f32 to vector<16x128xf32>
    %69 = arith.minimumf %68, %67 : vector<16x128xf32>
    %cst_40 = arith.constant 1.000000e+01 : f32
    %70 = vector.broadcast %cst_40 : f32 to vector<16x128xf32>
    %71 = arith.subf %69, %70 : vector<16x128xf32>
    %72 = math.exp %71 : vector<16x128xf32>
    %cst_41 = arith.constant 0.000000e+00 : f32
    %73 = vector.broadcast %cst_41 : f32 to vector<16x128xf32>
    %74 = arith.select %10, %72, %73 : vector<16x128xi1>, vector<16x128xf32>
    %75 = vector.extract_strided_slice %64 {offsets = [16, 0], sizes = [16, 128], strides = [1, 1]} : vector<32x128xf32> to vector<16x128xf32>
    %76 = arith.negf %75 : vector<16x128xf32>
    %77 = math.exp %76 : vector<16x128xf32>
    %cst_42 = arith.constant 1.000000e+00 : f32
    %78 = vector.broadcast %cst_42 : f32 to vector<16x128xf32>
    %79 = arith.addf %78, %77 : vector<16x128xf32>
    %80 = arith.divf %78, %79 : vector<16x128xf32>
    %c1_43 = arith.constant 1 : index
    %c0_44 = arith.constant 0 : index
    %c0_45 = arith.constant 0 : index
    %81 = vector.load %arg9[%c1_43, %c0_44, %c0_45] : memref<2x16x1xf32, #tpu.memory_space<vmem>>, vector<1x16x1xf32>
    %82 = vector.shape_cast %81 : vector<1x16x1xf32> to vector<16x1xf32>
    %cst_46 = arith.constant dense<0.000000e+00> : vector<16xf32>
    %83 = vector.multi_reduction <add>, %74, %cst_46 [1] : vector<16x128xf32> to vector<16xf32>
    %84 = vector.shape_cast %83 : vector<16xf32> to vector<16x1xf32>
    %85 = arith.addf %82, %84 : vector<16x1xf32>
    %c1_47 = arith.constant 1 : index
    %c0_48 = arith.constant 0 : index
    %c0_49 = arith.constant 0 : index
    %86 = vector.load %arg9[%c1_47, %c0_48, %c0_49] : memref<2x16x1xf32, #tpu.memory_space<vmem>>, vector<1x16x1xf32>
    %87 = vector.shape_cast %86 : vector<1x16x1xf32> to vector<16x1xf32>
    %88 = vector.shape_cast %85 : vector<16x1xf32> to vector<1x16x1xf32>
    tpu.vector_store %arg9[%c1_47, %c0_48, %c0_49], %88 {strides = array<i32>} : memref<2x16x1xf32, #tpu.memory_space<vmem>>, vector<1x16x1xf32>,
    %c1_50 = arith.constant 1 : index
    %c0_51 = arith.constant 0 : index
    %c0_52 = arith.constant 0 : index
    %89 = vector.load %arg10[%c1_50, %c0_51, %c0_52] : memref<2x16x1xf32, #tpu.memory_space<vmem>>, vector<1x16x1xf32>
    %90 = vector.shape_cast %89 : vector<1x16x1xf32> to vector<16x1xf32>
    %91 = arith.mulf %74, %80 : vector<16x128xf32>
    %cst_53 = arith.constant dense<0.000000e+00> : vector<16xf32>
    %92 = vector.multi_reduction <add>, %91, %cst_53 [1] : vector<16x128xf32> to vector<16xf32>
    %93 = vector.shape_cast %92 : vector<16xf32> to vector<16x1xf32>
    %94 = arith.addf %90, %93 : vector<16x1xf32>
    %c1_54 = arith.constant 1 : index
    %c0_55 = arith.constant 0 : index
    %c0_56 = arith.constant 0 : index
    %95 = vector.load %arg10[%c1_54, %c0_55, %c0_56] : memref<2x16x1xf32, #tpu.memory_space<vmem>>, vector<1x16x1xf32>
    %96 = vector.shape_cast %95 : vector<1x16x1xf32> to vector<16x1xf32>
    %97 = vector.shape_cast %94 : vector<16x1xf32> to vector<1x16x1xf32>
    tpu.vector_store %arg10[%c1_54, %c0_55, %c0_56], %97 {strides = array<i32>} : memref<2x16x1xf32, #tpu.memory_space<vmem>>, vector<1x16x1xf32>,
    %c1_57 = arith.constant 1 : index
    %c0_58 = arith.constant 0 : index
    %c0_59 = arith.constant 0 : index
    %98 = vector.load %arg7[%c1_57, %c0_58, %c0_59] : memref<2x16x128xf32, #tpu.memory_space<vmem>>, vector<1x16x128xf32>
    %99 = vector.shape_cast %98 : vector<1x16x128xf32> to vector<16x128xf32>
    %100 = vector.shape_cast %80 : vector<16x128xf32> to vector<1x16x128xf32>
    tpu.vector_store %arg7[%c1_57, %c0_58, %c0_59], %100 {strides = array<i32>} : memref<2x16x128xf32, #tpu.memory_space<vmem>>, vector<1x16x128xf32>,
    %c1_60 = arith.constant 1 : index
    %c0_61 = arith.constant 0 : index
    %c0_62 = arith.constant 0 : index
    %101 = vector.load %arg9[%c1_60, %c0_61, %c0_62] : memref<2x16x1xf32, #tpu.memory_space<vmem>>, vector<1x16x1xf32>
    %102 = vector.shape_cast %101 : vector<1x16x1xf32> to vector<16x1xf32>
    %103 = tpu.reciprocal %102 : vector<16x1xf32> -> vector<16x1xf32>
    %104 = vector.broadcast %103 : vector<16x1xf32> to vector<16x128xf32>
    %105 = arith.mulf %74, %104 : vector<16x128xf32>
    %c1_63 = arith.constant 1 : index
    %c0_64 = arith.constant 0 : index
    %c0_65 = arith.constant 0 : index
    %106 = vector.load %arg6[%c1_63, %c0_64, %c0_65] : memref<2x16x128xf32, #tpu.memory_space<vmem>>, vector<1x16x128xf32>
    %107 = vector.shape_cast %106 : vector<1x16x128xf32> to vector<16x128xf32>
    %108 = vector.shape_cast %105 : vector<16x128xf32> to vector<1x16x128xf32>
    tpu.vector_store %arg6[%c1_63, %c0_64, %c0_65], %108 {strides = array<i32>} : memref<2x16x128xf32, #tpu.memory_space<vmem>>, vector<1x16x128xf32>,
    %c0_i32_66 = arith.constant 0 : i32
    %109 = arith.cmpi eq, %arg1, %c0_i32_66 : i32
    %110 = arith.extui %109 : i1 to i32
    %c0_i32_67 = arith.constant 0 : i32
    %111 = arith.cmpi ne, %110, %c0_i32_67 : i32
    scf.if %111 {
      %c0_68 = arith.constant 0 : index
      %c0_69 = arith.constant 0 : index
      %c0_70 = arith.constant 0 : index
      %112 = vector.load %arg9[%c0_68, %c0_69, %c0_70] : memref<2x16x1xf32, #tpu.memory_space<vmem>>, vector<2x16x1xf32>
      %113 = tpu.reciprocal %112 : vector<2x16x1xf32> -> vector<2x16x1xf32>
      %c0_71 = arith.constant 0 : index
      %c0_72 = arith.constant 0 : index
      %c0_73 = arith.constant 0 : index
      %114 = vector.load %arg10[%c0_71, %c0_72, %c0_73] : memref<2x16x1xf32, #tpu.memory_space<vmem>>, vector<2x16x1xf32>
      %115 = arith.mulf %114, %113 : vector<2x16x1xf32>
      %c0_74 = arith.constant 0 : index
      %c0_75 = arith.constant 0 : index
      %c0_76 = arith.constant 0 : index
      %116 = vector.load %arg5[%c0_74, %c0_75, %c0_76] : memref<2x16x1xf32, #tpu.memory_space<vmem>>, vector<2x16x1xf32>
      tpu.vector_store %arg5[%c0_74, %c0_75, %c0_76], %115 {strides = array<i32>} : memref<2x16x1xf32, #tpu.memory_space<vmem>>, vector<2x16x1xf32>,
      %c0_77 = arith.constant 0 : index
      %c0_78 = arith.constant 0 : index
      %c0_79 = arith.constant 0 : index
      %117 = vector.load %arg8[%c0_77, %c0_78, %c0_79] : memref<2x16x1xf32, #tpu.memory_space<vmem>>, vector<2x16x1xf32>
      tpu.vector_store %arg8[%c0_77, %c0_78, %c0_79], %113 {strides = array<i32>} : memref<2x16x1xf32, #tpu.memory_space<vmem>>, vector<2x16x1xf32>,
    } else {
    }
    return
  }
  func.func @transform_0(%arg0: i32, %arg1: i32) -> (i32, i32, i32) {
    %c0_i32 = arith.constant 0 : i32
    %c0_i32_0 = arith.constant 0 : i32
    return %arg0, %c0_i32, %arg1 : i32, i32, i32
  }
  func.func @transform_1(%arg0: i32, %arg1: i32) -> (i32, i32) {
    %c0_i32 = arith.constant 0 : i32
    %c0_i32_0 = arith.constant 0 : i32
    %c0_i32_1 = arith.constant 0 : i32
    return %c0_i32, %c0_i32_0 : i32, i32
  }
  func.func @transform_2(%arg0: i32, %arg1: i32) -> (i32, i32) {
    %c0_i32 = arith.constant 0 : i32
    %c0_i32_0 = arith.constant 0 : i32
    %c0_i32_1 = arith.constant 0 : i32
    return %c0_i32, %c0_i32_0 : i32, i32
  }
  func.func @transform_3(%arg0: i32, %arg1: i32) -> (i32, i32, i32) {
    %c0_i32 = arith.constant 0 : i32
    %c0_i32_0 = arith.constant 0 : i32
    %c0_i32_1 = arith.constant 0 : i32
    return %arg0, %c0_i32, %c0_i32_0 : i32, i32, i32
  }
  func.func @transform_4(%arg0: i32, %arg1: i32) -> (i32, i32, i32) {
    %c0_i32 = arith.constant 0 : i32
    %c0_i32_0 = arith.constant 0 : i32
    return %arg0, %c0_i32, %arg1 : i32, i32, i32
  }
  func.func @transform_5(%arg0: i32, %arg1: i32) -> (i32, i32, i32) {
    %c0_i32 = arith.constant 0 : i32
    %c0_i32_0 = arith.constant 0 : i32
    return %arg0, %c0_i32, %arg1 : i32, i32, i32
  }
  func.func @transform_6(%arg0: i32, %arg1: i32) -> (i32, i32, i32) {
    %c0_i32 = arith.constant 0 : i32
    %c0_i32_0 = arith.constant 0 : i32
    %c0_i32_1 = arith.constant 0 : i32
    return %arg0, %c0_i32, %c0_i32_0 : i32, i32, i32
  }
}

</mosaic_0001>

<llo_original>
// kernel: tpu_custom_call.1
$region0: #{tpu_custom_call.1}
  #allocation0 [shape = 'u32[]', space=smem, size = 0x4, offset = 0x4, fixed_abs, tag = 'smem constant byte address 0x4 - core index']
  #allocation1 [shape = 'u32[72,128]{1,0:T(1,128)}', space=vmem, size = 0x9000, scoped, tag = 'internal scratch']
  #allocation2 [shape = 'f32[2,16,1]{2,1,0:T(8,128)}', space=vmem, size = 0x4000, scoped, tag = 'scratch operand']
  #allocation3 [shape = 'f32[2,16,1]{2,1,0:T(8,128)}', space=vmem, size = 0x4000, scoped, tag = 'scratch operand']
  %s0 = inlined_call_operand.hbm [shape: f32[2,32,128], index: 0, kind: input, shape index: {}]
  %s1 = inlined_call_operand.vmem [shape: f32[32,32], index: 1, kind: input, shape index: {}]
  %s2 = inlined_call_operand.vmem [shape: f32[32,1], index: 2, kind: input, shape index: {}]
  %s3 = inlined_call_operand.vmem [shape: f32[2,16,1], index: 3, kind: output, shape index: {0}]
  %s4 = inlined_call_operand.hbm [shape: f32[2,16,128], index: 4, kind: output, shape index: {1}]
  %s5 = inlined_call_operand.hbm [shape: f32[2,16,128], index: 5, kind: output, shape index: {2}]
  %s6 = inlined_call_operand.vmem [shape: f32[2,16,1], index: 6, kind: output, shape index: {3}]
  %7 = xla_tuple %s3, %s4, %s5, %s6
  %s8 = sld [smem:[#allocation0]]
  $region58: #{tpu_custom_call.1} parent=0
    _
  %s10 = ssub.s32 1, %s8
  %s11 = scalar_select 0, %s10, %s8
  $region1: #{tpu_custom_call.1} parent=0
    #allocation4 [shape = 'u8[32768]{0}', space=vmem, size = 0x8000, scoped, tag = 'input window, operand 0, single buffered']
    #allocation5 [shape = 's32[1]{0}', space=sflag, size = 0x4, scoped, tag = 'scoped memory for tpu_custom_call.1']
    #allocation6 [shape = 's32[1]{0}', space=sflag, size = 0x4, scoped, tag = 'scoped memory for tpu_custom_call.1']
    #allocation7 [shape = 'u8[16384]{0}', space=vmem, size = 0x4000, scoped, tag = 'output window, operand 1, single buffered']
    #allocation8 [shape = 'u8[16384]{0}', space=vmem, size = 0x4000, scoped, tag = 'output window, operand 2, single buffered']
    #allocation9 [shape = 's32[1]{0}', space=sflag, size = 0x4, scoped, tag = 'scoped memory for tpu_custom_call.1']
    %12 = vsyncpa [#allocation5], 0
    %13 = vsyncpa [#allocation6], 0
    %14 = vsyncpa [#allocation9], 0
    // Predicated region
    $region2: #{tpu_custom_call.1} parent=1 // pred_check
      _
    $region3: #{tpu_custom_call.1} parent=1 // pred_check_branch
      %16 = sbr.rel (0) target = $region5
    $region4: #{tpu_custom_call.1} parent=1 // pred_region
      %18 = vsyncadd [#allocation5], 0
      %s19 = sshll.u32 %s0, 4
      %s20 = int_to_ptr.hbm [resolvable:$true] %s19
      %s21 = sshll.u32 [#allocation4], 4
      %s22 = int_to_ptr.vmem [resolvable:$true] %s21
      %27 = dma.hbm_to_vmem [thread:$0]  %s20, 1024, %s22, [#allocation5], 128, 128, 8
    $region5: #{tpu_custom_call.1} parent=1 // pred_fallthru
      _
    // Predicated region
    $region6: #{tpu_custom_call.1} parent=1 // pred_check
      _
    $region7: #{tpu_custom_call.1} parent=1 // pred_check_branch
      %29 = sbr.rel (0) target = $region9
    $region8: #{tpu_custom_call.1} parent=1 // pred_region
      _
    $region9: #{tpu_custom_call.1} parent=1 // pred_fallthru
      _
    // Predicated region
    $region10: #{tpu_custom_call.1} parent=1 // pred_check
      _
    $region11: #{tpu_custom_call.1} parent=1 // pred_check_branch
      %31 = sbr.rel (0) target = $region13
    $region12: #{tpu_custom_call.1} parent=1 // pred_region
      _
    $region13: #{tpu_custom_call.1} parent=1 // pred_fallthru
      _
    // Predicated region
    $region14: #{tpu_custom_call.1} parent=1 // pred_check
      _
    $region15: #{tpu_custom_call.1} parent=1 // pred_check_branch
      %33 = sbr.rel (0) target = $region17
    $region16: #{tpu_custom_call.1} parent=1 // pred_region
      %35 = dma.done [#allocation5], 1024
    $region17: #{tpu_custom_call.1} parent=1 // pred_fallthru
      _
    %p36 = scmp.eq.s32.totalorder 0, 0
    // Predicated region
    $region18: #{tpu_custom_call.1} parent=1 // pred_check
      %p37 = pneg %p36
    $region19: #{tpu_custom_call.1} parent=1 // pred_check_branch
      %39 = sbr.rel (%p37) target = $region21
    $region20: #{tpu_custom_call.1} parent=1 // pred_region
      %vm40 = vcmask 7168
      %41 = vst.msk [vmem:[#allocation2] sm:$0xff] %vm40, 0.0
      %42 = vst.msk [vmem:[#allocation2 + $0x8] sm:$0xff] %vm40, 0.0
      %43 = vst.msk [vmem:[#allocation2 + $0x10] sm:$0xff] %vm40, 0.0
      %44 = vst.msk [vmem:[#allocation2 + $0x18] sm:$0xff] %vm40, 0.0
      %45 = vst.msk [vmem:[#allocation3] sm:$0xff] %vm40, 0.0
      %46 = vst.msk [vmem:[#allocation3 + $0x8] sm:$0xff] %vm40, 0.0
      %47 = vst.msk [vmem:[#allocation3 + $0x10] sm:$0xff] %vm40, 0.0
      %48 = vst.msk [vmem:[#allocation3 + $0x18] sm:$0xff] %vm40, 0.0
    $region21: #{tpu_custom_call.1} parent=1 // pred_fallthru
      _
    %v49 = vld [vmem:[%s1] sm:$0xff]
    %v50 = vld [vmem:[%s1 + $0x8] sm:$0xff]
    %v51 = vld [vmem:[%s1 + $0x10] sm:$0xff]
    %v52 = vld [vmem:[%s1 + $0x18] sm:$0xff]
    %v53 = vld [vmem:[%s2] sm:$0xff]
    %v54 = vld [vmem:[%s2 + $0x8] sm:$0xff]
    %v55 = vld [vmem:[%s2 + $0x10] sm:$0xff]
    %v56 = vld [vmem:[%s2 + $0x18] sm:$0xff]
    %v57 = vlaneseq
    %v58 = vand.u32 %v57, 127
    %s59 = smul.u32 0, 128
    %v60 = vstv %s59
    %v61 = vadd.s32 %v58, %v60
    %vm62 = vcmp.lt.s32.totalorder %v61, 16
    %v63 = vld [vmem:[#allocation4] sm:$0xff]
    %v64 = vld [vmem:[#allocation4 + $0x8] sm:$0xff]
    %v65 = vld [vmem:[#allocation4 + $0x10] sm:$0xff]
    %v66 = vld [vmem:[#allocation4 + $0x18] sm:$0xff]
    %68 = vset.pattern.permute.xlu0 0
    %69 = vperm.xlu0 %68, %v53
    %v70 = vpop.permute.xlu0 %69
    %73 = vset.pattern.permute.xlu0 0
    %74 = vperm.xlu0 %73, %v54
    %v75 = vpop.permute.xlu0 %74
    %78 = vset.pattern.permute.xlu0 0
    %79 = vperm.xlu0 %78, %v55
    %v80 = vpop.permute.xlu0 %79
    %83 = vset.pattern.permute.xlu0 0
    %84 = vperm.xlu0 %83, %v56
    %v85 = vpop.permute.xlu0 %84
    %vm87 = vcmask 261120
    %v89 = vsel %vm87, %v49, 0
    %v92 = vsel %vm87, %v50, 0
    %v95 = vsel %vm87, %v51, 0
    %v98 = vsel %vm87, %v52, 0
    %100 = vmatpush.msra.mxu0 0.0
    %101 = vmatpush.msra.mxu0 0.0
    %102 = vmatpush.msra.mxu0 0.0
    %103 = vmatpush.msra.mxu0 0.0
    %104 = vmatpush.msra.mxu0 0.0
    %105 = vmatpush.msra.mxu0 0.0
    %106 = vmatpush.msra.mxu0 0.0
    %107 = vmatpush.msra.mxu0 0.0
    %108 = vmatpush.msra.mxu0 0.0
    %109 = vmatpush.msra.mxu0 0.0
    %110 = vmatpush.msra.mxu0 0.0
    %111 = vmatpush.msra.mxu0 0.0
    %112 = vmatpush.msra.mxu0 %v66
    %113 = vmatpush.msra.mxu0 %v65
    %114 = vmatpush.msra.mxu0 %v64
    %115 = vmatpush.msra.mxu0 %v63
    %116 = vmatmul.f32.gmra.mxu0 %v89
    %v117 = vpop.f32.mrf.mxu0
    %v118 = vadd.f32 %v70, %v117
    %119 = vmatmul.f32.gmra.mxu0 %v92
    %v120 = vpop.f32.mrf.mxu0
    %v121 = vadd.f32 %v75, %v120
    %122 = vmatmul.f32.gmra.mxu0 %v95
    %v123 = vpop.f32.mrf.mxu0
    %v124 = vadd.f32 %v80, %v123
    %125 = vmatmul.f32.gmra.mxu0 %v98
    %v126 = vpop.f32.mrf.mxu0
    %v127 = vadd.f32 %v85, %v126
    %128 = vdwg.mxu0
    %v129 = vmax.f32 %v118, -10.0
    %v130 = vmax.f32 %v121, -10.0
    %v131 = vmin.f32 %v129, 10.0
    %v132 = vmin.f32 %v130, 10.0
    %v133 = vsub.f32 %v131, 10.0
    %v134 = vsub.f32 %v132, 10.0
    %v135 = vmul.f32 %v133, 1.442695
    %v136 = vpow.pop %v135
    %v137 = vmul.f32 %v134, 1.442695
    %v138 = vpow.pop %v137
    %v139 = vsel %vm62, %v136, 0.0
    %v140 = vsel %vm62, %v138, 0.0
    %v141 = vxor.u32 %v124, 2147483648
    %v142 = vxor.u32 %v127, 2147483648
    %v143 = vmul.f32 %v141, 1.442695
    %v144 = vpow.pop %v143
    %v145 = vmul.f32 %v142, 1.442695
    %v146 = vpow.pop %v145
    %v147 = vadd.f32 %v144, 1.0
    %v148 = vadd.f32 %v146, 1.0
    %v149 = vrcp.pop %v147
    %v150 = vmul.f32 %v147, %v149
    %v151 = vsub.f32 1.0, %v150
    %v152 = vmul.f32 %v149, %v151
    %v153 = vadd.f32 %v149, %v152
    %vm154 = vweird.f32 %v147
    %vm155 = vweird.f32 %v149
    %vm156 = vmor %vm154, %vm155
    %v157 = vsel %vm156, %v149, %v153
    %v158 = vand.u32 2147483647, %v147
    %vm159 = vcmp.eq.f32.partialorder %v158, 8.507059e+37
    %v160 = vand.u32 %v147, 2147483648
    %v161 = vor.u32 1.1754944e-38, %v160
    %v162 = vsel %vm159, %v161, %v157
    %v163 = vmul.f32 1.0, %v162
    %v164 = vrcp.pop %v148
    %v165 = vmul.f32 %v148, %v164
    %v166 = vsub.f32 1.0, %v165
    %v167 = vmul.f32 %v164, %v166
    %v168 = vadd.f32 %v164, %v167
    %vm169 = vweird.f32 %v148
    %vm170 = vweird.f32 %v164
    %vm171 = vmor %vm169, %vm170
    %v172 = vsel %vm171, %v164, %v168
    %v173 = vand.u32 2147483647, %v148
    %vm174 = vcmp.eq.f32.partialorder %v173, 8.507059e+37
    %v175 = vand.u32 %v148, 2147483648
    %v176 = vor.u32 1.1754944e-38, %v175
    %v177 = vsel %vm174, %v176, %v172
    %v178 = vmul.f32 1.0, %v177
    %v179 = vld [vmem:[#allocation2] sm:$0xff]
    %v180 = vld [vmem:[#allocation2 + $0x8] sm:$0xff]
    %181 = vadd.xlane.f32.xlu0 %v139
    %v182 = vpop.xlane.xlu0 %181
    %183 = vadd.xlane.f32.xlu0 %v140
    %v184 = vpop.xlane.xlu0 %183
    %v185 = vadd.f32 %v179, %v182
    %v186 = vadd.f32 %v180, %v184
    %vm187 = vcmask 7168
    %188 = vst.msk [vmem:[#allocation2] sm:$0xff] %vm187, %v185
    %189 = vst.msk [vmem:[#allocation2 + $0x8] sm:$0xff] %vm187, %v186
    %v190 = vld [vmem:[#allocation3] sm:$0xff]
    %v191 = vld [vmem:[#allocation3 + $0x8] sm:$0xff]
    %v192 = vmul.f32 %v139, %v163
    %v193 = vmul.f32 %v140, %v178
    %194 = vadd.xlane.f32.xlu0 %v192
    %v195 = vpop.xlane.xlu0 %194
    %196 = vadd.xlane.f32.xlu0 %v193
    %v197 = vpop.xlane.xlu0 %196
    %v198 = vadd.f32 %v190, %v195
    %v199 = vadd.f32 %v191, %v197
    %200 = vst.msk [vmem:[#allocation3] sm:$0xff] %vm187, %v198
    %201 = vst.msk [vmem:[#allocation3 + $0x8] sm:$0xff] %vm187, %v199
    %202 = vst [vmem:[#allocation8] sm:$0xff] %v163
    %203 = vst [vmem:[#allocation8 + $0x8] sm:$0xff] %v178
    %v204 = vld [vmem:[#allocation2] sm:$0xff]
    %v205 = vld [vmem:[#allocation2 + $0x8] sm:$0xff]
    %v206 = vrcp.pop %v204
    %v207 = vmul.f32 %v204, %v206
    %v208 = vsub.f32 1.0, %v207
    %v209 = vmul.f32 %v206, %v208
    %v210 = vadd.f32 %v206, %v209
    %vm211 = vweird.f32 %v204
    %vm212 = vweird.f32 %v206
    %vm213 = vmor %vm211, %vm212
    %v214 = vsel %vm213, %v206, %v210
    %v215 = vand.u32 2147483647, %v204
    %vm216 = vcmp.eq.f32.partialorder %v215, 8.507059e+37
    %v217 = vand.u32 %v204, 2147483648
    %v218 = vor.u32 1.1754944e-38, %v217
    %v219 = vsel %vm216, %v218, %v214
    %v220 = vrcp.pop %v205
    %v221 = vmul.f32 %v205, %v220
    %v222 = vsub.f32 1.0, %v221
    %v223 = vmul.f32 %v220, %v222
    %v224 = vadd.f32 %v220, %v223
    %vm225 = vweird.f32 %v205
    %vm226 = vweird.f32 %v220
    %vm227 = vmor %vm225, %vm226
    %v228 = vsel %vm227, %v220, %v224
    %v229 = vand.u32 2147483647, %v205
    %vm230 = vcmp.eq.f32.partialorder %v229, 8.507059e+37
    %v231 = vand.u32 %v205, 2147483648
    %v232 = vor.u32 1.1754944e-38, %v231
    %v233 = vsel %vm230, %v232, %v228
    %235 = vset.pattern.permute.xlu0 0
    %236 = vperm.xlu0 %235, %v219
    %v237 = vpop.permute.xlu0 %236
    %240 = vset.pattern.permute.xlu0 0
    %241 = vperm.xlu0 %240, %v233
    %v242 = vpop.permute.xlu0 %241
    %v244 = vmul.f32 %v139, %v237
    %v245 = vmul.f32 %v140, %v242
    %246 = vst [vmem:[#allocation7] sm:$0xff] %v244
    %247 = vst [vmem:[#allocation7 + $0x8] sm:$0xff] %v245
    %s248 = scalar_lea.vmem [#allocation4], 32
    %v249 = vld [vmem:[%s248] sm:$0xff]
    %v250 = vld [vmem:[%s248 + $0x8] sm:$0xff]
    %v251 = vld [vmem:[%s248 + $0x10] sm:$0xff]
    %v252 = vld [vmem:[%s248 + $0x18] sm:$0xff]
    %253 = vmatpush.msra.mxu0 0.0
    %254 = vmatpush.msra.mxu0 0.0
    %255 = vmatpush.msra.mxu0 0.0
    %256 = vmatpush.msra.mxu0 0.0
    %257 = vmatpush.msra.mxu0 0.0
    %258 = vmatpush.msra.mxu0 0.0
    %259 = vmatpush.msra.mxu0 0.0
    %260 = vmatpush.msra.mxu0 0.0
    %261 = vmatpush.msra.mxu0 0.0
    %262 = vmatpush.msra.mxu0 0.0
    %263 = vmatpush.msra.mxu0 0.0
    %264 = vmatpush.msra.mxu0 0.0
    %265 = vmatpush.msra.mxu0 %v252
    %266 = vmatpush.msra.mxu0 %v251
    %267 = vmatpush.msra.mxu0 %v250
    %268 = vmatpush.msra.mxu0 %v249
    %269 = vmatmul.f32.gmra.mxu0 %v89
    %v270 = vpop.f32.mrf.mxu0
    %v271 = vadd.f32 %v70, %v270
    %272 = vmatmul.f32.gmra.mxu0 %v92
    %v273 = vpop.f32.mrf.mxu0
    %v274 = vadd.f32 %v75, %v273
    %275 = vmatmul.f32.gmra.mxu0 %v95
    %v276 = vpop.f32.mrf.mxu0
    %v277 = vadd.f32 %v80, %v276
    %278 = vmatmul.f32.gmra.mxu0 %v98
    %v279 = vpop.f32.mrf.mxu0
    %v280 = vadd.f32 %v85, %v279
    %281 = vdwg.mxu0
    %v282 = vmax.f32 %v271, -10.0
    %v283 = vmax.f32 %v274, -10.0
    %v284 = vmin.f32 %v282, 10.0
    %v285 = vmin.f32 %v283, 10.0
    %v286 = vsub.f32 %v284, 10.0
    %v287 = vsub.f32 %v285, 10.0
    %v288 = vmul.f32 %v286, 1.442695
    %v289 = vpow.pop %v288
    %v290 = vmul.f32 %v287, 1.442695
    %v291 = vpow.pop %v290
    %v292 = vsel %vm62, %v289, 0.0
    %v293 = vsel %vm62, %v291, 0.0
    %v294 = vxor.u32 %v277, 2147483648
    %v295 = vxor.u32 %v280, 2147483648
    %v296 = vmul.f32 %v294, 1.442695
    %v297 = vpow.pop %v296
    %v298 = vmul.f32 %v295, 1.442695
    %v299 = vpow.pop %v298
    %v300 = vadd.f32 %v297, 1.0
    %v301 = vadd.f32 %v299, 1.0
    %v302 = vrcp.pop %v300
    %v303 = vmul.f32 %v300, %v302
    %v304 = vsub.f32 1.0, %v303
    %v305 = vmul.f32 %v302, %v304
    %v306 = vadd.f32 %v302, %v305
    %vm307 = vweird.f32 %v300
    %vm308 = vweird.f32 %v302
    %vm309 = vmor %vm307, %vm308
    %v310 = vsel %vm309, %v302, %v306
    %v311 = vand.u32 2147483647, %v300
    %vm312 = vcmp.eq.f32.partialorder %v311, 8.507059e+37
    %v313 = vand.u32 %v300, 2147483648
    %v314 = vor.u32 1.1754944e-38, %v313
    %v315 = vsel %vm312, %v314, %v310
    %v316 = vmul.f32 1.0, %v315
    %v317 = vrcp.pop %v301
    %v318 = vmul.f32 %v301, %v317
    %v319 = vsub.f32 1.0, %v318
    %v320 = vmul.f32 %v317, %v319
    %v321 = vadd.f32 %v317, %v320
    %vm322 = vweird.f32 %v301
    %vm323 = vweird.f32 %v317
    %vm324 = vmor %vm322, %vm323
    %v325 = vsel %vm324, %v317, %v321
    %v326 = vand.u32 2147483647, %v301
    %vm327 = vcmp.eq.f32.partialorder %v326, 8.507059e+37
    %v328 = vand.u32 %v301, 2147483648
    %v329 = vor.u32 1.1754944e-38, %v328
    %v330 = vsel %vm327, %v329, %v325
    %v331 = vmul.f32 1.0, %v330
    %s332 = scalar_lea.vmem [#allocation2], 16
    %v333 = vld [vmem:[%s332] sm:$0xff]
    %v334 = vld [vmem:[%s332 + $0x8] sm:$0xff]
    %335 = vadd.xlane.f32.xlu0 %v292
    %v336 = vpop.xlane.xlu0 %335
    %337 = vadd.xlane.f32.xlu0 %v293
    %v338 = vpop.xlane.xlu0 %337
    %v339 = vadd.f32 %v333, %v336
    %v340 = vadd.f32 %v334, %v338
    %341 = vst.msk [vmem:[%s332] sm:$0xff] %vm187, %v339
    %342 = vst.msk [vmem:[%s332 + $0x8] sm:$0xff] %vm187, %v340
    %s343 = scalar_lea.vmem [#allocation3], 16
    %v344 = vld [vmem:[%s343] sm:$0xff]
    %v345 = vld [vmem:[%s343 + $0x8] sm:$0xff]
    %v346 = vmul.f32 %v292, %v316
    %v347 = vmul.f32 %v293, %v331
    %348 = vadd.xlane.f32.xlu0 %v346
    %v349 = vpop.xlane.xlu0 %348
    %350 = vadd.xlane.f32.xlu0 %v347
    %v351 = vpop.xlane.xlu0 %350
    %v352 = vadd.f32 %v344, %v349
    %v353 = vadd.f32 %v345, %v351
    %354 = vst.msk [vmem:[%s343] sm:$0xff] %vm187, %v352
    %355 = vst.msk [vmem:[%s343 + $0x8] sm:$0xff] %vm187, %v353
    %s356 = scalar_lea.vmem [#allocation8], 16
    %357 = vst [vmem:[%s356] sm:$0xff] %v316
    %358 = vst [vmem:[%s356 + $0x8] sm:$0xff] %v331
    %v359 = vld [vmem:[%s332] sm:$0xff]
    %v360 = vld [vmem:[%s332 + $0x8] sm:$0xff]
    %v361 = vrcp.pop %v359
    %v362 = vmul.f32 %v359, %v361
    %v363 = vsub.f32 1.0, %v362
    %v364 = vmul.f32 %v361, %v363
    %v365 = vadd.f32 %v361, %v364
    %vm366 = vweird.f32 %v359
    %vm367 = vweird.f32 %v361
    %vm368 = vmor %vm366, %vm367
    %v369 = vsel %vm368, %v361, %v365
    %v370 = vand.u32 2147483647, %v359
    %vm371 = vcmp.eq.f32.partialorder %v370, 8.507059e+37
    %v372 = vand.u32 %v359, 2147483648
    %v373 = vor.u32 1.1754944e-38, %v372
    %v374 = vsel %vm371, %v373, %v369
    %v375 = vrcp.pop %v360
    %v376 = vmul.f32 %v360, %v375
    %v377 = vsub.f32 1.0, %v376
    %v378 = vmul.f32 %v375, %v377
    %v379 = vadd.f32 %v375, %v378
    %vm380 = vweird.f32 %v360
    %vm381 = vweird.f32 %v375
    %vm382 = vmor %vm380, %vm381
    %v383 = vsel %vm382, %v375, %v379
    %v384 = vand.u32 2147483647, %v360
    %vm385 = vcmp.eq.f32.partialorder %v384, 8.507059e+37
    %v386 = vand.u32 %v360, 2147483648
    %v387 = vor.u32 1.1754944e-38, %v386
    %v388 = vsel %vm385, %v387, %v383
    %390 = vset.pattern.permute.xlu0 0
    %391 = vperm.xlu0 %390, %v374
    %v392 = vpop.permute.xlu0 %391
    %395 = vset.pattern.permute.xlu0 0
    %396 = vperm.xlu0 %395, %v388
    %v397 = vpop.permute.xlu0 %396
    %v399 = vmul.f32 %v292, %v392
    %v400 = vmul.f32 %v293, %v397
    %s401 = scalar_lea.vmem [#allocation7], 16
    %402 = vst [vmem:[%s401] sm:$0xff] %v399
    %403 = vst [vmem:[%s401 + $0x8] sm:$0xff] %v400
    // Predicated region
    $region22: #{tpu_custom_call.1} parent=1 // pred_check
      %p404 = pneg %p36
    $region23: #{tpu_custom_call.1} parent=1 // pred_check_branch
      %406 = sbr.rel (%p404) target = $region25
    $region24: #{tpu_custom_call.1} parent=1 // pred_region
      %v407 = vld [vmem:[#allocation2] sm:$0xff]
      %v408 = vld [vmem:[#allocation2 + $0x8] sm:$0xff]
      %v409 = vld [vmem:[#allocation2 + $0x10] sm:$0xff]
      %v410 = vld [vmem:[#allocation2 + $0x18] sm:$0xff]
      %v411 = vrcp.pop %v407
      %v412 = vmul.f32 %v407, %v411
      %v413 = vsub.f32 1.0, %v412
      %v414 = vmul.f32 %v411, %v413
      %v415 = vadd.f32 %v411, %v414
      %vm416 = vweird.f32 %v407
      %vm417 = vweird.f32 %v411
      %vm418 = vmor %vm416, %vm417
      %v419 = vsel %vm418, %v411, %v415
      %v420 = vand.u32 2147483647, %v407
      %vm421 = vcmp.eq.f32.partialorder %v420, 8.507059e+37
      %v422 = vand.u32 %v407, 2147483648
      %v423 = vor.u32 1.1754944e-38, %v422
      %v424 = vsel %vm421, %v423, %v419
      %v425 = vrcp.pop %v408
      %v426 = vmul.f32 %v408, %v425
      %v427 = vsub.f32 1.0, %v426
      %v428 = vmul.f32 %v425, %v427
      %v429 = vadd.f32 %v425, %v428
      %vm430 = vweird.f32 %v408
      %vm431 = vweird.f32 %v425
      %vm432 = vmor %vm430, %vm431
      %v433 = vsel %vm432, %v425, %v429
      %v434 = vand.u32 2147483647, %v408
      %vm435 = vcmp.eq.f32.partialorder %v434, 8.507059e+37
      %v436 = vand.u32 %v408, 2147483648
      %v437 = vor.u32 1.1754944e-38, %v436
      %v438 = vsel %vm435, %v437, %v433
      %v439 = vrcp.pop %v409
      %v440 = vmul.f32 %v409, %v439
      %v441 = vsub.f32 1.0, %v440
      %v442 = vmul.f32 %v439, %v441
      %v443 = vadd.f32 %v439, %v442
      %vm444 = vweird.f32 %v409
      %vm445 = vweird.f32 %v439
      %vm446 = vmor %vm444, %vm445
      %v447 = vsel %vm446, %v439, %v443
      %v448 = vand.u32 2147483647, %v409
      %vm449 = vcmp.eq.f32.partialorder %v448, 8.507059e+37
      %v450 = vand.u32 %v409, 2147483648
      %v451 = vor.u32 1.1754944e-38, %v450
      %v452 = vsel %vm449, %v451, %v447
      %v453 = vrcp.pop %v410
      %v454 = vmul.f32 %v410, %v453
      %v455 = vsub.f32 1.0, %v454
      %v456 = vmul.f32 %v453, %v455
      %v457 = vadd.f32 %v453, %v456
      %vm458 = vweird.f32 %v410
      %vm459 = vweird.f32 %v453
      %vm460 = vmor %vm458, %vm459
      %v461 = vsel %vm460, %v453, %v457
      %v462 = vand.u32 2147483647, %v410
      %vm463 = vcmp.eq.f32.partialorder %v462, 8.507059e+37
      %v464 = vand.u32 %v410, 2147483648
      %v465 = vor.u32 1.1754944e-38, %v464
      %v466 = vsel %vm463, %v465, %v461
      %v467 = vld [vmem:[#allocation3] sm:$0xff]
      %v468 = vld [vmem:[#allocation3 + $0x8] sm:$0xff]
      %v469 = vld [vmem:[#allocation3 + $0x10] sm:$0xff]
      %v470 = vld [vmem:[#allocation3 + $0x18] sm:$0xff]
      %v471 = vmul.f32 %v467, %v424
      %v472 = vmul.f32 %v468, %v438
      %v473 = vmul.f32 %v469, %v452
      %v474 = vmul.f32 %v470, %v466
      %475 = vst.msk [vmem:[%s3] sm:$0xff] %vm187, %v471
      %476 = vst.msk [vmem:[%s3 + $0x8] sm:$0xff] %vm187, %v472
      %477 = vst.msk [vmem:[%s3 + $0x10] sm:$0xff] %vm187, %v473
      %478 = vst.msk [vmem:[%s3 + $0x18] sm:$0xff] %vm187, %v474
      %479 = vst.msk [vmem:[%s6] sm:$0xff] %vm187, %v424
      %480 = vst.msk [vmem:[%s6 + $0x8] sm:$0xff] %vm187, %v438
      %481 = vst.msk [vmem:[%s6 + $0x10] sm:$0xff] %vm187, %v452
      %482 = vst.msk [vmem:[%s6 + $0x18] sm:$0xff] %vm187, %v466
    $region25: #{tpu_custom_call.1} parent=1 // pred_fallthru
      _
    // Predicated region
    $region26: #{tpu_custom_call.1} parent=1 // pred_check
      _
    $region27: #{tpu_custom_call.1} parent=1 // pred_check_branch
      %484 = sbr.rel (0) target = $region29
    $region28: #{tpu_custom_call.1} parent=1 // pred_region
      _
    $region29: #{tpu_custom_call.1} parent=1 // pred_fallthru
      _
    // Predicated region
    $region30: #{tpu_custom_call.1} parent=1 // pred_check
      _
    $region31: #{tpu_custom_call.1} parent=1 // pred_check_branch
      %486 = sbr.rel (0) target = $region33
    $region32: #{tpu_custom_call.1} parent=1 // pred_region
      %488 = vsyncadd [#allocation6], 0
      %s489 = sshll.u32 [#allocation7], 4
      %s490 = int_to_ptr.vmem [resolvable:$true] %s489
      %s491 = sshll.u32 %s4, 4
      %s492 = int_to_ptr.hbm [resolvable:$true] %s491
      %497 = dma.vmem_to_hbm [thread:$0]  %s490, 512, %s492, [#allocation6], 128, 128, 8
    $region33: #{tpu_custom_call.1} parent=1 // pred_fallthru
      _
    // Predicated region
    $region34: #{tpu_custom_call.1} parent=1 // pred_check
      _
    $region35: #{tpu_custom_call.1} parent=1 // pred_check_branch
      %499 = sbr.rel (0) target = $region37
    $region36: #{tpu_custom_call.1} parent=1 // pred_region
      %501 = vsyncadd [#allocation9], 0
      %s502 = sshll.u32 [#allocation8], 4
      %s503 = int_to_ptr.vmem [resolvable:$true] %s502
      %s504 = sshll.u32 %s5, 4
      %s505 = int_to_ptr.hbm [resolvable:$true] %s504
      %510 = dma.vmem_to_hbm [thread:$0]  %s503, 512, %s505, [#allocation9], 128, 128, 8
    $region37: #{tpu_custom_call.1} parent=1 // pred_fallthru
      _
    // Predicated region
    $region38: #{tpu_custom_call.1} parent=1 // pred_check
      _
    $region39: #{tpu_custom_call.1} parent=1 // pred_check_branch
      %512 = sbr.rel (0) target = $region41
    $region40: #{tpu_custom_call.1} parent=1 // pred_region
      _
    $region41: #{tpu_custom_call.1} parent=1 // pred_fallthru
      _
    // Predicated region
    $region42: #{tpu_custom_call.1} parent=1 // pred_check
      _
    $region43: #{tpu_custom_call.1} parent=1 // pred_check_branch
      %514 = sbr.rel (0) target = $region45
    $region44: #{tpu_custom_call.1} parent=1 // pred_region
      _
    $region45: #{tpu_custom_call.1} parent=1 // pred_fallthru
      _
    // Predicated region
    $region46: #{tpu_custom_call.1} parent=1 // pred_check
      _
    $region47: #{tpu_custom_call.1} parent=1 // pred_check_branch
      %516 = sbr.rel (0) target = $region49
    $region48: #{tpu_custom_call.1} parent=1 // pred_region
      %518 = dma.done [#allocation6], 512
    $region49: #{tpu_custom_call.1} parent=1 // pred_fallthru
      _
    // Predicated region
    $region50: #{tpu_custom_call.1} parent=1 // pred_check
      _
    $region51: #{tpu_custom_call.1} parent=1 // pred_check_branch
      %520 = sbr.rel (0) target = $region53
    $region52: #{tpu_custom_call.1} parent=1 // pred_region
      %522 = dma.done [#allocation9], 512
    $region53: #{tpu_custom_call.1} parent=1 // pred_fallthru
      _
    // Predicated region
    $region54: #{tpu_custom_call.1} parent=1 // pred_check
      _
    $region55: #{tpu_custom_call.1} parent=1 // pred_check_branch
      %524 = sbr.rel (0) target = $region57
    $region56: #{tpu_custom_call.1} parent=1 // pred_region
      _
    $region57: #{tpu_custom_call.1} parent=1 // pred_fallthru
      _
    %525 = vsyncpa [#allocation5], 1
    %526 = vsyncpa [#allocation6], 1
    %527 = vsyncpa [#allocation9], 1

// kernel: tpu_custom_call.1
$region0: #{tpu_custom_call.1}
  #allocation0 [shape = 'u32[]', space=smem, size = 0x4, offset = 0x4, fixed_abs, tag = 'smem constant byte address 0x4 - core index']
  #allocation1 [shape = 'u32[72,128]{1,0:T(1,128)}', space=vmem, size = 0x9000, scoped, tag = 'internal scratch']
  #allocation2 [shape = 'f32[2,16,1]{2,1,0:T(8,128)}', space=vmem, size = 0x4000, scoped, tag = 'scratch operand']
  #allocation3 [shape = 'f32[2,16,1]{2,1,0:T(8,128)}', space=vmem, size = 0x4000, scoped, tag = 'scratch operand']
  %s0 = inlined_call_operand.hbm [shape: f32[2,32,128], index: 0, kind: input, shape index: {}]
  %s1 = inlined_call_operand.vmem [shape: f32[32,32], index: 1, kind: input, shape index: {}]
  %s2 = inlined_call_operand.vmem [shape: f32[32,1], index: 2, kind: input, shape index: {}]
  %s3 = inlined_call_operand.vmem [shape: f32[2,16,1], index: 3, kind: output, shape index: {0}]
  %s4 = inlined_call_operand.hbm [shape: f32[2,16,128], index: 4, kind: output, shape index: {1}]
  %s5 = inlined_call_operand.hbm [shape: f32[2,16,128], index: 5, kind: output, shape index: {2}]
  %s6 = inlined_call_operand.vmem [shape: f32[2,16,1], index: 6, kind: output, shape index: {3}]
  %7 = xla_tuple %s3, %s4, %s5, %s6
  %s8 = sld [smem:[#allocation0]]
  $region58: #{tpu_custom_call.1} parent=0
    _
  %s10 = ssub.s32 1, %s8
  %s11 = scalar_select 0, %s10, %s8
  $region1: #{tpu_custom_call.1} parent=0
    #allocation4 [shape = 'u8[32768]{0}', space=vmem, size = 0x8000, scoped, tag = 'input window, operand 0, single buffered']
    #allocation5 [shape = 's32[1]{0}', space=sflag, size = 0x4, scoped, tag = 'scoped memory for tpu_custom_call.1']
    #allocation6 [shape = 's32[1]{0}', space=sflag, size = 0x4, scoped, tag = 'scoped memory for tpu_custom_call.1']
    #allocation7 [shape = 'u8[16384]{0}', space=vmem, size = 0x4000, scoped, tag = 'output window, operand 1, single buffered']
    #allocation8 [shape = 'u8[16384]{0}', space=vmem, size = 0x4000, scoped, tag = 'output window, operand 2, single buffered']
    #allocation9 [shape = 's32[1]{0}', space=sflag, size = 0x4, scoped, tag = 'scoped memory for tpu_custom_call.1']
    %12 = vsyncpa [#allocation5], 0
    %13 = vsyncpa [#allocation6], 0
    %14 = vsyncpa [#allocation9], 0
    // Predicated region
    $region2: #{tpu_custom_call.1} parent=1 // pred_check
      _
    $region3: #{tpu_custom_call.1} parent=1 // pred_check_branch
      %16 = sbr.rel (0) target = $region5
    $region4: #{tpu_custom_call.1} parent=1 // pred_region
      %18 = vsyncadd [#allocation5], 0
      %s19 = sshll.u32 %s0, 4
      %s20 = int_to_ptr.hbm [resolvable:$true] %s19
      %s21 = sshll.u32 [#allocation4], 4
      %s22 = int_to_ptr.vmem [resolvable:$true] %s21
      %27 = dma.hbm_to_vmem [thread:$0]  %s20, 1024, %s22, [#allocation5], 128, 128, 8
    $region5: #{tpu_custom_call.1} parent=1 // pred_fallthru
      _
    // Predicated region
    $region6: #{tpu_custom_call.1} parent=1 // pred_check
      _
    $region7: #{tpu_custom_call.1} parent=1 // pred_check_branch
      %29 = sbr.rel (0) target = $region9
    $region8: #{tpu_custom_call.1} parent=1 // pred_region
      _
    $region9: #{tpu_custom_call.1} parent=1 // pred_fallthru
      _
    // Predicated region
    $region10: #{tpu_custom_call.1} parent=1 // pred_check
      _
    $region11: #{tpu_custom_call.1} parent=1 // pred_check_branch
      %31 = sbr.rel (0) target = $region13
    $region12: #{tpu_custom_call.1} parent=1 // pred_region
      _
    $region13: #{tpu_custom_call.1} parent=1 // pred_fallthru
      _
    // Predicated region
    $region14: #{tpu_custom_call.1} parent=1 // pred_check
      _
    $region15: #{tpu_custom_call.1} parent=1 // pred_check_branch
      %33 = sbr.rel (0) target = $region17
    $region16: #{tpu_custom_call.1} parent=1 // pred_region
      %35 = dma.done [#allocation5], 1024
    $region17: #{tpu_custom_call.1} parent=1 // pred_fallthru
      _
    %p36 = scmp.eq.s32.totalorder 0, 0
    // Predicated region
    $region18: #{tpu_custom_call.1} parent=1 // pred_check
      %p37 = pneg %p36
    $region19: #{tpu_custom_call.1} parent=1 // pred_check_branch
      %39 = sbr.rel (%p37) target = $region21
    $region20: #{tpu_custom_call.1} parent=1 // pred_region
      %vm40 = vcmask 7168
      %41 = vst.msk [vmem:[#allocation2] sm:$0xff] %vm40, 0.0
      %42 = vst.msk [vmem:[#allocation2 + $0x8] sm:$0xff] %vm40, 0.0
      %43 = vst.msk [vmem:[#allocation2 + $0x10] sm:$0xff] %vm40, 0.0
      %44 = vst.msk [vmem:[#allocation2 + $0x18] sm:$0xff] %vm40, 0.0
      %45 = vst.msk [vmem:[#allocation3] sm:$0xff] %vm40, 0.0
      %46 = vst.msk [vmem:[#allocation3 + $0x8] sm:$0xff] %vm40, 0.0
      %47 = vst.msk [vmem:[#allocation3 + $0x10] sm:$0xff] %vm40, 0.0
      %48 = vst.msk [vmem:[#allocation3 + $0x18] sm:$0xff] %vm40, 0.0
    $region21: #{tpu_custom_call.1} parent=1 // pred_fallthru
      _
    %v49 = vld [vmem:[%s1] sm:$0xff]
    %v50 = vld [vmem:[%s1 + $0x8] sm:$0xff]
    %v51 = vld [vmem:[%s1 + $0x10] sm:$0xff]
    %v52 = vld [vmem:[%s1 + $0x18] sm:$0xff]
    %v53 = vld [vmem:[%s2] sm:$0xff]
    %v54 = vld [vmem:[%s2 + $0x8] sm:$0xff]
    %v55 = vld [vmem:[%s2 + $0x10] sm:$0xff]
    %v56 = vld [vmem:[%s2 + $0x18] sm:$0xff]
    %v57 = vlaneseq
    %v58 = vand.u32 %v57, 127
    %s59 = smul.u32 0, 128
    %v60 = vstv %s59
    %v61 = vadd.s32 %v58, %v60
    %vm62 = vcmp.lt.s32.totalorder %v61, 16
    %v63 = vld [vmem:[#allocation4] sm:$0xff]
    %v64 = vld [vmem:[#allocation4 + $0x8] sm:$0xff]
    %v65 = vld [vmem:[#allocation4 + $0x10] sm:$0xff]
    %v66 = vld [vmem:[#allocation4 + $0x18] sm:$0xff]
    %68 = vset.pattern.permute.xlu0 0
    %69 = vperm.xlu0 %68, %v53
    %v70 = vpop.permute.xlu0 %69
    %73 = vset.pattern.permute.xlu0 0
    %74 = vperm.xlu0 %73, %v54
    %v75 = vpop.permute.xlu0 %74
    %78 = vset.pattern.permute.xlu0 0
    %79 = vperm.xlu0 %78, %v55
    %v80 = vpop.permute.xlu0 %79
    %83 = vset.pattern.permute.xlu0 0
    %84 = vperm.xlu0 %83, %v56
    %v85 = vpop.permute.xlu0 %84
    %vm87 = vcmask 261120
    %v89 = vsel %vm87, %v49, 0
    %v92 = vsel %vm87, %v50, 0
    %v95 = vsel %vm87, %v51, 0
    %v98 = vsel %vm87, %v52, 0
    %100 = vmatpush.msra.mxu0 0.0
    %101 = vmatpush.msra.mxu0 0.0
    %102 = vmatpush.msra.mxu0 0.0
    %103 = vmatpush.msra.mxu0 0.0
    %104 = vmatpush.msra.mxu0 0.0
    %105 = vmatpush.msra.mxu0 0.0
    %106 = vmatpush.msra.mxu0 0.0
    %107 = vmatpush.msra.mxu0 0.0
    %108 = vmatpush.msra.mxu0 0.0
    %109 = vmatpush.msra.mxu0 0.0
    %110 = vmatpush.msra.mxu0 0.0
    %111 = vmatpush.msra.mxu0 0.0
    %112 = vmatpush.msra.mxu0 %v66
    %113 = vmatpush.msra.mxu0 %v65
    %114 = vmatpush.msra.mxu0 %v64
    %115 = vmatpush.msra.mxu0 %v63
    %116 = vmatmul.f32.gmra.mxu0 %v89
    %v117 = vpop.f32.mrf.mxu0
    %v118 = vadd.f32 %v70, %v117
    %119 = vmatmul.f32.gmra.mxu0 %v92
    %v120 = vpop.f32.mrf.mxu0
    %v121 = vadd.f32 %v75, %v120
    %122 = vmatmul.f32.gmra.mxu0 %v95
    %v123 = vpop.f32.mrf.mxu0
    %v124 = vadd.f32 %v80, %v123
    %125 = vmatmul.f32.gmra.mxu0 %v98
    %v126 = vpop.f32.mrf.mxu0
    %v127 = vadd.f32 %v85, %v126
    %128 = vdwg.mxu0
    %v129 = vmax.f32 %v118, -10.0
    %v130 = vmax.f32 %v121, -10.0
    %v131 = vmin.f32 %v129, 10.0
    %v132 = vmin.f32 %v130, 10.0
    %v133 = vsub.f32 %v131, 10.0
    %v134 = vsub.f32 %v132, 10.0
    %v135 = vmul.f32 %v133, 1.442695
    %v136 = vpow.pop %v135
    %v137 = vmul.f32 %v134, 1.442695
    %v138 = vpow.pop %v137
    %v139 = vsel %vm62, %v136, 0.0
    %v140 = vsel %vm62, %v138, 0.0
    %v141 = vxor.u32 %v124, 2147483648
    %v142 = vxor.u32 %v127, 2147483648
    %v143 = vmul.f32 %v141, 1.442695
    %v144 = vpow.pop %v143
    %v145 = vmul.f32 %v142, 1.442695
    %v146 = vpow.pop %v145
    %v147 = vadd.f32 %v144, 1.0
    %v148 = vadd.f32 %v146, 1.0
    %v149 = vrcp.pop %v147
    %v150 = vmul.f32 %v147, %v149
    %v151 = vsub.f32 1.0, %v150
    %v152 = vmul.f32 %v149, %v151
    %v153 = vadd.f32 %v149, %v152
    %vm154 = vweird.f32 %v147
    %vm155 = vweird.f32 %v149
    %vm156 = vmor %vm154, %vm155
    %v157 = vsel %vm156, %v149, %v153
    %v158 = vand.u32 2147483647, %v147
    %vm159 = vcmp.eq.f32.partialorder %v158, 8.507059e+37
    %v160 = vand.u32 %v147, 2147483648
    %v161 = vor.u32 1.1754944e-38, %v160
    %v162 = vsel %vm159, %v161, %v157
    %v163 = vmul.f32 1.0, %v162
    %v164 = vrcp.pop %v148
    %v165 = vmul.f32 %v148, %v164
    %v166 = vsub.f32 1.0, %v165
    %v167 = vmul.f32 %v164, %v166
    %v168 = vadd.f32 %v164, %v167
    %vm169 = vweird.f32 %v148
    %vm170 = vweird.f32 %v164
    %vm171 = vmor %vm169, %vm170
    %v172 = vsel %vm171, %v164, %v168
    %v173 = vand.u32 2147483647, %v148
    %vm174 = vcmp.eq.f32.partialorder %v173, 8.507059e+37
    %v175 = vand.u32 %v148, 2147483648
    %v176 = vor.u32 1.1754944e-38, %v175
    %v177 = vsel %vm174, %v176, %v172
    %v178 = vmul.f32 1.0, %v177
    %v179 = vld [vmem:[#allocation2] sm:$0xff]
    %v180 = vld [vmem:[#allocation2 + $0x8] sm:$0xff]
    %181 = vadd.xlane.f32.xlu0 %v139
    %v182 = vpop.xlane.xlu0 %181
    %183 = vadd.xlane.f32.xlu0 %v140
    %v184 = vpop.xlane.xlu0 %183
    %v185 = vadd.f32 %v179, %v182
    %v186 = vadd.f32 %v180, %v184
    %vm187 = vcmask 7168
    %188 = vst.msk [vmem:[#allocation2] sm:$0xff] %vm187, %v185
    %189 = vst.msk [vmem:[#allocation2 + $0x8] sm:$0xff] %vm187, %v186
    %v190 = vld [vmem:[#allocation3] sm:$0xff]
    %v191 = vld [vmem:[#allocation3 + $0x8] sm:$0xff]
    %v192 = vmul.f32 %v139, %v163
    %v193 = vmul.f32 %v140, %v178
    %194 = vadd.xlane.f32.xlu0 %v192
    %v195 = vpop.xlane.xlu0 %194
    %196 = vadd.xlane.f32.xlu0 %v193
    %v197 = vpop.xlane.xlu0 %196
    %v198 = vadd.f32 %v190, %v195
    %v199 = vadd.f32 %v191, %v197
    %200 = vst.msk [vmem:[#allocation3] sm:$0xff] %vm187, %v198
    %201 = vst.msk [vmem:[#allocation3 + $0x8] sm:$0xff] %vm187, %v199
    %202 = vst [vmem:[#allocation8] sm:$0xff] %v163
    %203 = vst [vmem:[#allocation8 + $0x8] sm:$0xff] %v178
    %v204 = vld [vmem:[#allocation2] sm:$0xff]
    %v205 = vld [vmem:[#allocation2 + $0x8] sm:$0xff]
    %v206 = vrcp.pop %v204
    %v207 = vmul.f32 %v204, %v206
    %v208 = vsub.f32 1.0, %v207
    %v209 = vmul.f32 %v206, %v208
    %v210 = vadd.f32 %v206, %v209
    %vm211 = vweird.f32 %v204
    %vm212 = vweird.f32 %v206
    %vm213 = vmor %vm211, %vm212
    %v214 = vsel %vm213, %v206, %v210
    %v215 = vand.u32 2147483647, %v204
    %vm216 = vcmp.eq.f32.partialorder %v215, 8.507059e+37
    %v217 = vand.u32 %v204, 2147483648
    %v218 = vor.u32 1.1754944e-38, %v217
    %v219 = vsel %vm216, %v218, %v214
    %v220 = vrcp.pop %v205
    %v221 = vmul.f32 %v205, %v220
    %v222 = vsub.f32 1.0, %v221
    %v223 = vmul.f32 %v220, %v222
    %v224 = vadd.f32 %v220, %v223
    %vm225 = vweird.f32 %v205
    %vm226 = vweird.f32 %v220
    %vm227 = vmor %vm225, %vm226
    %v228 = vsel %vm227, %v220, %v224
    %v229 = vand.u32 2147483647, %v205
    %vm230 = vcmp.eq.f32.partialorder %v229, 8.507059e+37
    %v231 = vand.u32 %v205, 2147483648
    %v232 = vor.u32 1.1754944e-38, %v231
    %v233 = vsel %vm230, %v232, %v228
    %235 = vset.pattern.permute.xlu0 0
    %236 = vperm.xlu0 %235, %v219
    %v237 = vpop.permute.xlu0 %236
    %240 = vset.pattern.permute.xlu0 0
    %241 = vperm.xlu0 %240, %v233
    %v242 = vpop.permute.xlu0 %241
    %v244 = vmul.f32 %v139, %v237
    %v245 = vmul.f32 %v140, %v242
    %246 = vst [vmem:[#allocation7] sm:$0xff] %v244
    %247 = vst [vmem:[#allocation7 + $0x8] sm:$0xff] %v245
    %s248 = scalar_lea.vmem [#allocation4], 32
    %v249 = vld [vmem:[%s248] sm:$0xff]
    %v250 = vld [vmem:[%s248 + $0x8] sm:$0xff]
    %v251 = vld [vmem:[%s248 + $0x10] sm:$0xff]
    %v252 = vld [vmem:[%s248 + $0x18] sm:$0xff]
    %253 = vmatpush.msra.mxu0 0.0
    %254 = vmatpush.msra.mxu0 0.0
    %255 = vmatpush.msra.mxu0 0.0
    %256 = vmatpush.msra.mxu0 0.0
    %257 = vmatpush.msra.mxu0 0.0
    %258 = vmatpush.msra.mxu0 0.0
    %259 = vmatpush.msra.mxu0 0.0
    %260 = vmatpush.msra.mxu0 0.0
    %261 = vmatpush.msra.mxu0 0.0
    %262 = vmatpush.msra.mxu0 0.0
    %263 = vmatpush.msra.mxu0 0.0
    %264 = vmatpush.msra.mxu0 0.0
    %265 = vmatpush.msra.mxu0 %v252
    %266 = vmatpush.msra.mxu0 %v251
    %267 = vmatpush.msra.mxu0 %v250
    %268 = vmatpush.msra.mxu0 %v249
    %269 = vmatmul.f32.gmra.mxu0 %v89
    %v270 = vpop.f32.mrf.mxu0
    %v271 = vadd.f32 %v70, %v270
    %272 = vmatmul.f32.gmra.mxu0 %v92
    %v273 = vpop.f32.mrf.mxu0
    %v274 = vadd.f32 %v75, %v273
    %275 = vmatmul.f32.gmra.mxu0 %v95
    %v276 = vpop.f32.mrf.mxu0
    %v277 = vadd.f32 %v80, %v276
    %278 = vmatmul.f32.gmra.mxu0 %v98
    %v279 = vpop.f32.mrf.mxu0
    %v280 = vadd.f32 %v85, %v279
    %281 = vdwg.mxu0
    %v282 = vmax.f32 %v271, -10.0
    %v283 = vmax.f32 %v274, -10.0
    %v284 = vmin.f32 %v282, 10.0
    %v285 = vmin.f32 %v283, 10.0
    %v286 = vsub.f32 %v284, 10.0
    %v287 = vsub.f32 %v285, 10.0
    %v288 = vmul.f32 %v286, 1.442695
    %v289 = vpow.pop %v288
    %v290 = vmul.f32 %v287, 1.442695
    %v291 = vpow.pop %v290
    %v292 = vsel %vm62, %v289, 0.0
    %v293 = vsel %vm62, %v291, 0.0
    %v294 = vxor.u32 %v277, 2147483648
    %v295 = vxor.u32 %v280, 2147483648
    %v296 = vmul.f32 %v294, 1.442695
    %v297 = vpow.pop %v296
    %v298 = vmul.f32 %v295, 1.442695
    %v299 = vpow.pop %v298
    %v300 = vadd.f32 %v297, 1.0
    %v301 = vadd.f32 %v299, 1.0
    %v302 = vrcp.pop %v300
    %v303 = vmul.f32 %v300, %v302
    %v304 = vsub.f32 1.0, %v303
    %v305 = vmul.f32 %v302, %v304
    %v306 = vadd.f32 %v302, %v305
    %vm307 = vweird.f32 %v300
    %vm308 = vweird.f32 %v302
    %vm309 = vmor %vm307, %vm308
    %v310 = vsel %vm309, %v302, %v306
    %v311 = vand.u32 2147483647, %v300
    %vm312 = vcmp.eq.f32.partialorder %v311, 8.507059e+37
    %v313 = vand.u32 %v300, 2147483648
    %v314 = vor.u32 1.1754944e-38, %v313
    %v315 = vsel %vm312, %v314, %v310
    %v316 = vmul.f32 1.0, %v315
    %v317 = vrcp.pop %v301
    %v318 = vmul.f32 %v301, %v317
    %v319 = vsub.f32 1.0, %v318
    %v320 = vmul.f32 %v317, %v319
    %v321 = vadd.f32 %v317, %v320
    %vm322 = vweird.f32 %v301
    %vm323 = vweird.f32 %v317
    %vm324 = vmor %vm322, %vm323
    %v325 = vsel %vm324, %v317, %v321
    %v326 = vand.u32 2147483647, %v301
    %vm327 = vcmp.eq.f32.partialorder %v326, 8.507059e+37
    %v328 = vand.u32 %v301, 2147483648
    %v329 = vor.u32 1.1754944e-38, %v328
    %v330 = vsel %vm327, %v329, %v325
    %v331 = vmul.f32 1.0, %v330
    %s332 = scalar_lea.vmem [#allocation2], 16
    %v333 = vld [vmem:[%s332] sm:$0xff]
    %v334 = vld [vmem:[%s332 + $0x8] sm:$0xff]
    %335 = vadd.xlane.f32.xlu0 %v292
    %v336 = vpop.xlane.xlu0 %335
    %337 = vadd.xlane.f32.xlu0 %v293
    %v338 = vpop.xlane.xlu0 %337
    %v339 = vadd.f32 %v333, %v336
    %v340 = vadd.f32 %v334, %v338
    %341 = vst.msk [vmem:[%s332] sm:$0xff] %vm187, %v339
    %342 = vst.msk [vmem:[%s332 + $0x8] sm:$0xff] %vm187, %v340
    %s343 = scalar_lea.vmem [#allocation3], 16
    %v344 = vld [vmem:[%s343] sm:$0xff]
    %v345 = vld [vmem:[%s343 + $0x8] sm:$0xff]
    %v346 = vmul.f32 %v292, %v316
    %v347 = vmul.f32 %v293, %v331
    %348 = vadd.xlane.f32.xlu0 %v346
    %v349 = vpop.xlane.xlu0 %348
    %350 = vadd.xlane.f32.xlu0 %v347
    %v351 = vpop.xlane.xlu0 %350
    %v352 = vadd.f32 %v344, %v349
    %v353 = vadd.f32 %v345, %v351
    %354 = vst.msk [vmem:[%s343] sm:$0xff] %vm187, %v352
    %355 = vst.msk [vmem:[%s343 + $0x8] sm:$0xff] %vm187, %v353
    %s356 = scalar_lea.vmem [#allocation8], 16
    %357 = vst [vmem:[%s356] sm:$0xff] %v316
    %358 = vst [vmem:[%s356 + $0x8] sm:$0xff] %v331
    %v359 = vld [vmem:[%s332] sm:$0xff]
    %v360 = vld [vmem:[%s332 + $0x8] sm:$0xff]
    %v361 = vrcp.pop %v359
    %v362 = vmul.f32 %v359, %v361
    %v363 = vsub.f32 1.0, %v362
    %v364 = vmul.f32 %v361, %v363
    %v365 = vadd.f32 %v361, %v364
    %vm366 = vweird.f32 %v359
    %vm367 = vweird.f32 %v361
    %vm368 = vmor %vm366, %vm367
    %v369 = vsel %vm368, %v361, %v365
    %v370 = vand.u32 2147483647, %v359
    %vm371 = vcmp.eq.f32.partialorder %v370, 8.507059e+37
    %v372 = vand.u32 %v359, 2147483648
    %v373 = vor.u32 1.1754944e-38, %v372
    %v374 = vsel %vm371, %v373, %v369
    %v375 = vrcp.pop %v360
    %v376 = vmul.f32 %v360, %v375
    %v377 = vsub.f32 1.0, %v376
    %v378 = vmul.f32 %v375, %v377
    %v379 = vadd.f32 %v375, %v378
    %vm380 = vweird.f32 %v360
    %vm381 = vweird.f32 %v375
    %vm382 = vmor %vm380, %vm381
    %v383 = vsel %vm382, %v375, %v379
    %v384 = vand.u32 2147483647, %v360
    %vm385 = vcmp.eq.f32.partialorder %v384, 8.507059e+37
    %v386 = vand.u32 %v360, 2147483648
    %v387 = vor.u32 1.1754944e-38, %v386
    %v388 = vsel %vm385, %v387, %v383
    %390 = vset.pattern.permute.xlu0 0
    %391 = vperm.xlu0 %390, %v374
    %v392 = vpop.permute.xlu0 %391
    %395 = vset.pattern.permute.xlu0 0
    %396 = vperm.xlu0 %395, %v388
    %v397 = vpop.permute.xlu0 %396
    %v399 = vmul.f32 %v292, %v392
    %v400 = vmul.f32 %v293, %v397
    %s401 = scalar_lea.vmem [#allocation7], 16
    %402 = vst [vmem:[%s401] sm:$0xff] %v399
    %403 = vst [vmem:[%s401 + $0x8] sm:$0xff] %v400
    // Predicated region
    $region22: #{tpu_custom_call.1} parent=1 // pred_check
      %p404 = pneg %p36
    $region23: #{tpu_custom_call.1} parent=1 // pred_check_branch
      %406 = sbr.rel (%p404) target = $region25
    $region24: #{tpu_custom_call.1} parent=1 // pred_region
      %v407 = vld [vmem:[#allocation2] sm:$0xff]
      %v408 = vld [vmem:[#allocation2 + $0x8] sm:$0xff]
      %v409 = vld [vmem:[#allocation2 + $0x10] sm:$0xff]
      %v410 = vld [vmem:[#allocation2 + $0x18] sm:$0xff]
      %v411 = vrcp.pop %v407
      %v412 = vmul.f32 %v407, %v411
      %v413 = vsub.f32 1.0, %v412
      %v414 = vmul.f32 %v411, %v413
      %v415 = vadd.f32 %v411, %v414
      %vm416 = vweird.f32 %v407
      %vm417 = vweird.f32 %v411
      %vm418 = vmor %vm416, %vm417
      %v419 = vsel %vm418, %v411, %v415
      %v420 = vand.u32 2147483647, %v407
      %vm421 = vcmp.eq.f32.partialorder %v420, 8.507059e+37
      %v422 = vand.u32 %v407, 2147483648
      %v423 = vor.u32 1.1754944e-38, %v422
      %v424 = vsel %vm421, %v423, %v419
      %v425 = vrcp.pop %v408
      %v426 = vmul.f32 %v408, %v425
      %v427 = vsub.f32 1.0, %v426
      %v428 = vmul.f32 %v425, %v427
      %v429 = vadd.f32 %v425, %v428
      %vm430 = vweird.f32 %v408
      %vm431 = vweird.f32 %v425
      %vm432 = vmor %vm430, %vm431
      %v433 = vsel %vm432, %v425, %v429
      %v434 = vand.u32 2147483647, %v408
      %vm435 = vcmp.eq.f32.partialorder %v434, 8.507059e+37
      %v436 = vand.u32 %v408, 2147483648
      %v437 = vor.u32 1.1754944e-38, %v436
      %v438 = vsel %vm435, %v437, %v433
      %v439 = vrcp.pop %v409
      %v440 = vmul.f32 %v409, %v439
      %v441 = vsub.f32 1.0, %v440
      %v442 = vmul.f32 %v439, %v441
      %v443 = vadd.f32 %v439, %v442
      %vm444 = vweird.f32 %v409
      %vm445 = vweird.f32 %v439
      %vm446 = vmor %vm444, %vm445
      %v447 = vsel %vm446, %v439, %v443
      %v448 = vand.u32 2147483647, %v409
      %vm449 = vcmp.eq.f32.partialorder %v448, 8.507059e+37
      %v450 = vand.u32 %v409, 2147483648
      %v451 = vor.u32 1.1754944e-38, %v450
      %v452 = vsel %vm449, %v451, %v447
      %v453 = vrcp.pop %v410
      %v454 = vmul.f32 %v410, %v453
      %v455 = vsub.f32 1.0, %v454
      %v456 = vmul.f32 %v453, %v455
      %v457 = vadd.f32 %v453, %v456
      %vm458 = vweird.f32 %v410
      %vm459 = vweird.f32 %v453
      %vm460 = vmor %vm458, %vm459
      %v461 = vsel %vm460, %v453, %v457
      %v462 = vand.u32 2147483647, %v410
      %vm463 = vcmp.eq.f32.partialorder %v462, 8.507059e+37
      %v464 = vand.u32 %v410, 2147483648
      %v465 = vor.u32 1.1754944e-38, %v464
      %v466 = vsel %vm463, %v465, %v461
      %v467 = vld [vmem:[#allocation3] sm:$0xff]
      %v468 = vld [vmem:[#allocation3 + $0x8] sm:$0xff]
      %v469 = vld [vmem:[#allocation3 + $0x10] sm:$0xff]
      %v470 = vld [vmem:[#allocation3 + $0x18] sm:$0xff]
      %v471 = vmul.f32 %v467, %v424
      %v472 = vmul.f32 %v468, %v438
      %v473 = vmul.f32 %v469, %v452
      %v474 = vmul.f32 %v470, %v466
      %475 = vst.msk [vmem:[%s3] sm:$0xff] %vm187, %v471
      %476 = vst.msk [vmem:[%s3 + $0x8] sm:$0xff] %vm187, %v472
      %477 = vst.msk [vmem:[%s3 + $0x10] sm:$0xff] %vm187, %v473
      %478 = vst.msk [vmem:[%s3 + $0x18] sm:$0xff] %vm187, %v474
      %479 = vst.msk [vmem:[%s6] sm:$0xff] %vm187, %v424
      %480 = vst.msk [vmem:[%s6 + $0x8] sm:$0xff] %vm187, %v438
      %481 = vst.msk [vmem:[%s6 + $0x10] sm:$0xff] %vm187, %v452
      %482 = vst.msk [vmem:[%s6 + $0x18] sm:$0xff] %vm187, %v466
    $region25: #{tpu_custom_call.1} parent=1 // pred_fallthru
      _
    // Predicated region
    $region26: #{tpu_custom_call.1} parent=1 // pred_check
      _
    $region27: #{tpu_custom_call.1} parent=1 // pred_check_branch
      %484 = sbr.rel (0) target = $region29
    $region28: #{tpu_custom_call.1} parent=1 // pred_region
      _
    $region29: #{tpu_custom_call.1} parent=1 // pred_fallthru
      _
    // Predicated region
    $region30: #{tpu_custom_call.1} parent=1 // pred_check
      _
    $region31: #{tpu_custom_call.1} parent=1 // pred_check_branch
      %486 = sbr.rel (0) target = $region33
    $region32: #{tpu_custom_call.1} parent=1 // pred_region
      %488 = vsyncadd [#allocation6], 0
      %s489 = sshll.u32 [#allocation7], 4
      %s490 = int_to_ptr.vmem [resolvable:$true] %s489
      %s491 = sshll.u32 %s4, 4
      %s492 = int_to_ptr.hbm [resolvable:$true] %s491
      %497 = dma.vmem_to_hbm [thread:$0]  %s490, 512, %s492, [#allocation6], 128, 128, 8
    $region33: #{tpu_custom_call.1} parent=1 // pred_fallthru
      _
    // Predicated region
    $region34: #{tpu_custom_call.1} parent=1 // pred_check
      _
    $region35: #{tpu_custom_call.1} parent=1 // pred_check_branch
      %499 = sbr.rel (0) target = $region37
    $region36: #{tpu_custom_call.1} parent=1 // pred_region
      %501 = vsyncadd [#allocation9], 0
      %s502 = sshll.u32 [#allocation8], 4
      %s503 = int_to_ptr.vmem [resolvable:$true] %s502
      %s504 = sshll.u32 %s5, 4
      %s505 = int_to_ptr.hbm [resolvable:$true] %s504
      %510 = dma.vmem_to_hbm [thread:$0]  %s503, 512, %s505, [#allocation9], 128, 128, 8
    $region37: #{tpu_custom_call.1} parent=1 // pred_fallthru
      _
    // Predicated region
    $region38: #{tpu_custom_call.1} parent=1 // pred_check
      _
    $region39: #{tpu_custom_call.1} parent=1 // pred_check_branch
      %512 = sbr.rel (0) target = $region41
    $region40: #{tpu_custom_call.1} parent=1 // pred_region
      _
    $region41: #{tpu_custom_call.1} parent=1 // pred_fallthru
      _
    // Predicated region
    $region42: #{tpu_custom_call.1} parent=1 // pred_check
      _
    $region43: #{tpu_custom_call.1} parent=1 // pred_check_branch
      %514 = sbr.rel (0) target = $region45
    $region44: #{tpu_custom_call.1} parent=1 // pred_region
      _
    $region45: #{tpu_custom_call.1} parent=1 // pred_fallthru
      _
    // Predicated region
    $region46: #{tpu_custom_call.1} parent=1 // pred_check
      _
    $region47: #{tpu_custom_call.1} parent=1 // pred_check_branch
      %516 = sbr.rel (0) target = $region49
    $region48: #{tpu_custom_call.1} parent=1 // pred_region
      %518 = dma.done [#allocation6], 512
    $region49: #{tpu_custom_call.1} parent=1 // pred_fallthru
      _
    // Predicated region
    $region50: #{tpu_custom_call.1} parent=1 // pred_check
      _
    $region51: #{tpu_custom_call.1} parent=1 // pred_check_branch
      %520 = sbr.rel (0) target = $region53
    $region52: #{tpu_custom_call.1} parent=1 // pred_region
      %522 = dma.done [#allocation9], 512
    $region53: #{tpu_custom_call.1} parent=1 // pred_fallthru
      _
    // Predicated region
    $region54: #{tpu_custom_call.1} parent=1 // pred_check
      _
    $region55: #{tpu_custom_call.1} parent=1 // pred_check_branch
      %524 = sbr.rel (0) target = $region57
    $region56: #{tpu_custom_call.1} parent=1 // pred_region
      _
    $region57: #{tpu_custom_call.1} parent=1 // pred_fallthru
      _
    %525 = vsyncpa [#allocation5], 1
    %526 = vsyncpa [#allocation6], 1
    %527 = vsyncpa [#allocation9], 1

</llo_original>
